<compile_context>
chip_gen: v7x
topology: tpu7x:2x2x1
jax: 0.10.0
libtpu: 0.0.40
codegen_flags: <defaults>
</compile_context>

<pallas_src>
import functools

import jax
import jax.numpy as jnp
from jax.experimental import pallas as pl
from jax.experimental.pallas import tpu as pltpu

_VMEM_LIMIT = 32 * 1024 * 1024  # safe on v5e/v6e (128 MiB) and v7x (64 MiB physical)


def _pick_tile(dim, cap, align):
    """Largest tile <= cap that divides dim and is `align`-aligned, else the full dim."""
    if dim <= cap:
        return dim
    t = (cap // align) * align
    while t >= align:
        if dim % t == 0:
            return t
        t -= align
    return dim


def _layernorm(x, gamma, beta, eps):
    # f32 statistics over the last dim (matches nn.LayerNorm, eps=1e-5 default).
    mean = jnp.mean(x, axis=-1, keepdims=True)
    c = x - mean
    var = jnp.mean(c * c, axis=-1, keepdims=True)
    return (c * jax.lax.rsqrt(var + eps)) * gamma + beta


# --------------------- tiled linear (input / output proj) ------------------- #

def _linear_kernel(x_ref, w_ref, b_ref, o_ref, acc_ref):
    @pl.when(pl.program_id(2) == 0)
    def _():
        acc_ref[...] = jnp.zeros_like(acc_ref)

    acc_ref[...] += jnp.dot(x_ref[...].astype(jnp.bfloat16), w_ref[...],
                            preferred_element_type=jnp.float32)

    @pl.when(pl.program_id(2) == pl.num_programs(2) - 1)
    def _():
        o_ref[...] = (acc_ref[...] + b_ref[...]).astype(o_ref.dtype)


def linear(x2d, w, b, *, tm_cap=256, tn_cap=512, tk_cap=512):
    M, K = x2d.shape
    N = w.shape[1]
    tm = _pick_tile(M, tm_cap, 8)
    tn = _pick_tile(N, tn_cap, 128)
    tk = _pick_tile(K, tk_cap, 128)
    return pl.pallas_call(
        _linear_kernel,
        out_shape=jax.ShapeDtypeStruct((M, N), jnp.float32),
        grid=(M // tm, N // tn, K // tk),
        in_specs=[
            pl.BlockSpec((tm, tk), lambda i, j, k: (i, k)),
            pl.BlockSpec((tk, tn), lambda i, j, k: (k, j)),
            pl.BlockSpec((1, tn), lambda i, j, k: (0, j)),
        ],
        out_specs=pl.BlockSpec((tm, tn), lambda i, j, k: (i, j)),
        scratch_shapes=[pltpu.VMEM((tm, tn), jnp.float32)],
        compiler_params=pltpu.CompilerParams(
            dimension_semantics=("parallel", "parallel", "arbitrary"),
            vmem_limit_bytes=_VMEM_LIMIT),
        cost_estimate=pl.CostEstimate(
            flops=2 * M * N * K, transcendentals=0,
            bytes_accessed=M * K * 4 + K * N * 2 + M * N * 4),
    )(x2d, w, b.reshape(1, N))


# ------ fused QKV-proj + attention + out-proj + residual + LayerNorm1 ------- #

def _attn_block_kernel(x_ref, wqkv_ref, bqkv_ref, wo_ref, bo_ref, g_ref, bln_ref,
                       o_ref, *, num_heads, scale, eps):
    x = x_ref[0]                                    # (S, E) f32 residual stream
    S, E = x.shape
    Dh = E // num_heads

    # QKV projection: bf16 operands, f32 accumulation.
    qkv = jnp.dot(x.astype(jnp.bfloat16), wqkv_ref[...],
                  preferred_element_type=jnp.float32) + bqkv_ref[...]
    q = qkv[:, 0 * E:1 * E]
    k = qkv[:, 1 * E:2 * E]
    v = qkv[:, 2 * E:3 * E]

    # Per-head attention (head loop is static; output re-packed lane-dense as (S, E)).
    heads = []
    for h in range(num_heads):
        sl = slice(h * Dh, (h + 1) * Dh)
        qh = (q[:, sl] * scale).astype(jnp.bfloat16)       # fold scale into q
        kh = k[:, sl].astype(jnp.bfloat16)
        vh = v[:, sl].astype(jnp.bfloat16)
        # q @ k^T via dot_general contracting on Dh (no explicit transpose of K).
        s = jax.lax.dot_general(qh, kh, (((1,), (1,)), ((), ())),
                                preferred_element_type=jnp.float32)   # (S, S) f32
        s = s - jnp.max(s, axis=-1, keepdims=True)
        p = jnp.exp(s)
        p = p * pl.reciprocal(jnp.sum(p, axis=-1, keepdims=True), approx=True)
        heads.append(jnp.dot(p.astype(jnp.bfloat16), vh,
                             preferred_element_type=jnp.float32))     # (S, Dh)
    attn = jnp.concatenate(heads, axis=-1)                             # (S, E)

    # Output projection + residual + post-LN (all fused, f32 stats).
    out = jnp.dot(attn.astype(jnp.bfloat16), wo_ref[...],
                  preferred_element_type=jnp.float32) + bo_ref[...]
    o_ref[0] = _layernorm(x + out, g_ref[...], bln_ref[...], eps)


def attention_block(x, p, num_heads, eps=1e-5):
    B, S, E = x.shape
    scale = 1.0 / ((E // num_heads) ** 0.5)
    return pl.pallas_call(
        functools.partial(_attn_block_kernel, num_heads=num_heads,
                          scale=scale, eps=eps),
        out_shape=jax.ShapeDtypeStruct((B, S, E), jnp.float32),
        grid=(B,),
        in_specs=[
            pl.BlockSpec((1, S, E), lambda b: (b, 0, 0)),
            pl.BlockSpec((E, 3 * E), lambda b: (0, 0)),
            pl.BlockSpec((1, 3 * E), lambda b: (0, 0)),
            pl.BlockSpec((E, E), lambda b: (0, 0)),
            pl.BlockSpec((1, E), lambda b: (0, 0)),
            pl.BlockSpec((1, E), lambda b: (0, 0)),
            pl.BlockSpec((1, E), lambda b: (0, 0)),
        ],
        out_specs=pl.BlockSpec((1, S, E), lambda b: (b, 0, 0)),
        compiler_params=pltpu.CompilerParams(
            dimension_semantics=("parallel",),
            vmem_limit_bytes=_VMEM_LIMIT),
    )(x, p["in_w"], p["in_b"].reshape(1, 3 * E),
      p["out_w"], p["out_b"].reshape(1, E),
      p["ln1_g"].reshape(1, E), p["ln1_b"].reshape(1, E))


# ------------- fused FF1 + ReLU + FF2 + residual + LayerNorm2 --------------- #

def _ffn_ln_kernel(x_ref, w1_ref, b1_ref, w2_ref, b2_ref, g_ref, bln_ref, o_ref,
                   *, eps):
    x = x_ref[...]                                   # (tm, E) f32 residual stream
    h = jnp.dot(x.astype(jnp.bfloat16), w1_ref[...],
                preferred_element_type=jnp.float32) + b1_ref[...]
    h = jnp.maximum(h, 0.0)                          # ReLU; intermediate stays in VMEM
    y = jnp.dot(h.astype(jnp.bfloat16), w2_ref[...],
                preferred_element_type=jnp.float32) + b2_ref[...]
    o_ref[...] = _layernorm(x + y, g_ref[...], bln_ref[...], eps)


def ffn_block(x2d, p, eps=1e-5, tm_cap=256):
    M, E = x2d.shape
    F = p["ff1_w"].shape[1]
    tm = _pick_tile(M, tm_cap, 8)
    return pl.pallas_call(
        functools.partial(_ffn_ln_kernel, eps=eps),
        out_shape=jax.ShapeDtypeStruct((M, E), jnp.float32),
        grid=(M // tm,),
        in_specs=[
            pl.BlockSpec((tm, E), lambda i: (i, 0)),
            pl.BlockSpec((E, F), lambda i: (0, 0)),
            pl.BlockSpec((1, F), lambda i: (0, 0)),
            pl.BlockSpec((F, E), lambda i: (0, 0)),
            pl.BlockSpec((1, E), lambda i: (0, 0)),
            pl.BlockSpec((1, E), lambda i: (0, 0)),
            pl.BlockSpec((1, E), lambda i: (0, 0)),
        ],
        out_specs=pl.BlockSpec((tm, E), lambda i: (i, 0)),
        compiler_params=pltpu.CompilerParams(
            dimension_semantics=("parallel",),
            vmem_limit_bytes=_VMEM_LIMIT),
    )(x2d, p["ff1_w"], p["ff1_b"].reshape(1, F),
      p["ff2_w"], p["ff2_b"].reshape(1, E),
      p["ln2_g"].reshape(1, E), p["ln2_b"].reshape(1, E))


# --------------------------- model forward (glue) --------------------------- #

@functools.partial(jax.jit, static_argnames=("num_heads",))
def transformer_model(x, params, *, num_heads):
    B, S, D = x.shape
    E = params["in_proj_w"].shape[1]

    h2d = linear(x.reshape(B * S, D), params["in_proj_w"], params["in_proj_b"])
    for lp in params["layers"]:
        h3d = attention_block(h2d.reshape(B, S, E), lp, num_heads)   # attn + LN1
        h2d = ffn_block(h3d.reshape(B * S, E), lp)                   # FFN  + LN2
    out2d = linear(h2d.reshape(B * S, E), params["out_proj_w"], params["out_proj_b"])
    return out2d.reshape(B, S, D)


# ------------------------------- param init --------------------------------- #

def init_params(key, input_dim, embed_dim, num_heads, num_layers, ffn_dim):
    def dense(k, fan_in, fan_out):
        w = jax.random.normal(k, (fan_in, fan_out), jnp.float32) * (fan_in ** -0.5)
        return w.astype(jnp.bfloat16)        # MXU operands in bf16, accumulate f32

    keys = jax.random.split(key, 4 + num_layers)
    params = {
        "in_proj_w": dense(keys[0], input_dim, embed_dim),
        "in_proj_b": jnp.zeros((embed_dim,), jnp.float32),
        "out_proj_w": dense(keys[1], embed_dim, input_dim),
        "out_proj_b": jnp.zeros((input_dim,), jnp.float32),
        "layers": [],
    }
    for li in range(num_layers):
        lk = jax.random.split(keys[4 + li], 4)
        params["layers"].append({
            "in_w": dense(lk[0], embed_dim, 3 * embed_dim),
            "in_b": jnp.zeros((3 * embed_dim,), jnp.float32),
            "out_w": dense(lk[1], embed_dim, embed_dim),
            "out_b": jnp.zeros((embed_dim,), jnp.float32),
            "ln1_g": jnp.ones((embed_dim,), jnp.float32),
            "ln1_b": jnp.zeros((embed_dim,), jnp.float32),
            "ln2_g": jnp.ones((embed_dim,), jnp.float32),
            "ln2_b": jnp.zeros((embed_dim,), jnp.float32),
            "ff1_w": dense(lk[2], embed_dim, ffn_dim),
            "ff1_b": jnp.zeros((ffn_dim,), jnp.float32),
            "ff2_w": dense(lk[3], ffn_dim, embed_dim),
            "ff2_b": jnp.zeros((embed_dim,), jnp.float32),
        })
    return params


# ----------------------------------- main ----------------------------------- #

if __name__ == "__main__":
    # Small shapes consistent with the module: (batch, seq, input_dim)
    B, S = 2, 8
    INPUT_DIM, EMBED_DIM, NUM_HEADS, NUM_LAYERS, FFN_DIM = 64, 64, 4, 2, 128

    key = jax.random.PRNGKey(0)
    k_x, k_p = jax.random.split(key)
    x = jax.random.normal(k_x, (B, S, INPUT_DIM), jnp.float32)
    params = init_params(k_p, INPUT_DIM, EMBED_DIM, NUM_HEADS, NUM_LAYERS, FFN_DIM)

    out = transformer_model(x, params, num_heads=NUM_HEADS)
    out = jax.block_until_ready(out)
    assert out.shape == (B, S, INPUT_DIM), out.shape
    assert bool(jnp.all(jnp.isfinite(out)))
    print("KERNEL_OK")
</pallas_src>

<mosaic_0001>
module attributes {stable_mosaic.version = 11 : i64} {
  func.func @_linear_kernel(%arg0: i32, %arg1: i32, %arg2: i32, %arg3: memref<16x64xf32, #tpu.memory_space<vmem>>, %arg4: memref<64x64xbf16, #tpu.memory_space<vmem>>, %arg5: memref<1x64xf32, #tpu.memory_space<vmem>>, %arg6: memref<16x64xf32, #tpu.memory_space<vmem>>, %arg7: memref<16x64xf32, #tpu.memory_space<vmem>>) attributes {dimension_semantics = [#tpu.dimension_semantics<parallel>, #tpu.dimension_semantics<parallel>, #tpu.dimension_semantics<arbitrary>], iteration_bounds = array<i64: 1, 1, 1>, scalar_prefetch = 0 : i64, scratch_operands = 1 : i64, tpu.core_type = #tpu.core_type<tc>, window_params = [{transform_indices = @transform_0, window_bounds = array<i64: 16, 64>}, {transform_indices = @transform_1, window_bounds = array<i64: 64, 64>}, {transform_indices = @transform_2, window_bounds = array<i64: 1, 64>}, {transform_indices = @transform_3, window_bounds = array<i64: 16, 64>}]} {
    %c0_i32 = arith.constant 0 : i32
    %0 = arith.cmpi eq, %arg2, %c0_i32 : i32
    %1 = arith.extui %0 : i1 to i32
    %c0_i32_0 = arith.constant 0 : i32
    %2 = arith.cmpi ne, %1, %c0_i32_0 : i32
    scf.if %2 {
      %cst_10 = arith.constant 0.000000e+00 : f32
      %13 = vector.broadcast %cst_10 : f32 to vector<16x64xf32>
      %c0_11 = arith.constant 0 : index
      %c0_12 = arith.constant 0 : index
      %14 = vector.load %arg7[%c0_11, %c0_12] : memref<16x64xf32, #tpu.memory_space<vmem>>, vector<16x64xf32>
      tpu.vector_store %arg7[%c0_11, %c0_12], %13 {strides = array<i32>} : memref<16x64xf32, #tpu.memory_space<vmem>>, vector<16x64xf32>,
    } else {
    }
    %c0 = arith.constant 0 : index
    %c0_1 = arith.constant 0 : index
    %3 = vector.load %arg7[%c0, %c0_1] : memref<16x64xf32, #tpu.memory_space<vmem>>, vector<16x64xf32>
    %c0_2 = arith.constant 0 : index
    %c0_3 = arith.constant 0 : index
    %4 = vector.load %arg3[%c0_2, %c0_3] : memref<16x64xf32, #tpu.memory_space<vmem>>, vector<16x64xf32>
    %5 = arith.truncf %4 : vector<16x64xf32> to vector<16x64xbf16>
    %c0_4 = arith.constant 0 : index
    %c0_5 = arith.constant 0 : index
    %6 = vector.load %arg4[%c0_4, %c0_5] : memref<64x64xbf16, #tpu.memory_space<vmem>>, vector<64x64xbf16>
    %cst = arith.constant dense<0.000000e+00> : vector<16x64xf32>
    %7 = tpu.matmul %5, %6, %cst {dimension_numbers = #tpu.dot_dimension_numbers<[1], [0], [0], [1], [0, 0, 1, 1], [], []>} : vector<16x64xbf16>, vector<64x64xbf16>, vector<16x64xf32> -> vector<16x64xf32>
    %8 = arith.addf %3, %7 : vector<16x64xf32>
    %c0_6 = arith.constant 0 : index
    %c0_7 = arith.constant 0 : index
    %9 = vector.load %arg7[%c0_6, %c0_7] : memref<16x64xf32, #tpu.memory_space<vmem>>, vector<16x64xf32>
    tpu.vector_store %arg7[%c0_6, %c0_7], %8 {strides = array<i32>} : memref<16x64xf32, #tpu.memory_space<vmem>>, vector<16x64xf32>,
    %c0_i32_8 = arith.constant 0 : i32
    %10 = arith.cmpi eq, %arg2, %c0_i32_8 : i32
    %11 = arith.extui %10 : i1 to i32
    %c0_i32_9 = arith.constant 0 : i32
    %12 = arith.cmpi ne, %11, %c0_i32_9 : i32
    scf.if %12 {
      %c0_10 = arith.constant 0 : index
      %c0_11 = arith.constant 0 : index
      %13 = vector.load %arg7[%c0_10, %c0_11] : memref<16x64xf32, #tpu.memory_space<vmem>>, vector<16x64xf32>
      %c0_12 = arith.constant 0 : index
      %c0_13 = arith.constant 0 : index
      %14 = vector.load %arg5[%c0_12, %c0_13] : memref<1x64xf32, #tpu.memory_space<vmem>>, vector<1x64xf32>
      %15 = vector.broadcast %14 : vector<1x64xf32> to vector<16x64xf32>
      %16 = arith.addf %13, %15 : vector<16x64xf32>
      %c0_14 = arith.constant 0 : index
      %c0_15 = arith.constant 0 : index
      %17 = vector.load %arg6[%c0_14, %c0_15] : memref<16x64xf32, #tpu.memory_space<vmem>>, vector<16x64xf32>
      tpu.vector_store %arg6[%c0_14, %c0_15], %16 {strides = array<i32>} : memref<16x64xf32, #tpu.memory_space<vmem>>, vector<16x64xf32>,
    } else {
    }
    return
  }
  func.func @transform_0(%arg0: i32, %arg1: i32, %arg2: i32) -> (i32, i32) {
    %c0_i32 = arith.constant 0 : i32
    return %arg0, %arg2 : i32, i32
  }
  func.func @transform_1(%arg0: i32, %arg1: i32, %arg2: i32) -> (i32, i32) {
    %c0_i32 = arith.constant 0 : i32
    return %arg2, %arg1 : i32, i32
  }
  func.func @transform_2(%arg0: i32, %arg1: i32, %arg2: i32) -> (i32, i32) {
    %c0_i32 = arith.constant 0 : i32
    %c0_i32_0 = arith.constant 0 : i32
    return %c0_i32, %arg1 : i32, i32
  }
  func.func @transform_3(%arg0: i32, %arg1: i32, %arg2: i32) -> (i32, i32) {
    %c0_i32 = arith.constant 0 : i32
    return %arg0, %arg1 : i32, i32
  }
}

module attributes {stable_mosaic.version = 11 : i64} {
  func.func @_ffn_ln_kernel(%arg0: i32, %arg1: memref<16x64xf32, #tpu.memory_space<vmem>>, %arg2: memref<64x128xbf16, #tpu.memory_space<vmem>>, %arg3: memref<1x128xf32, #tpu.memory_space<vmem>>, %arg4: memref<128x64xbf16, #tpu.memory_space<vmem>>, %arg5: memref<1x64xf32, #tpu.memory_space<vmem>>, %arg6: memref<1x64xf32, #tpu.memory_space<vmem>>, %arg7: memref<1x64xf32, #tpu.memory_space<vmem>>, %arg8: memref<16x64xf32, #tpu.memory_space<vmem>>) attributes {dimension_semantics = [#tpu.dimension_semantics<parallel>], iteration_bounds = array<i64: 1>, scalar_prefetch = 0 : i64, scratch_operands = 0 : i64, tpu.core_type = #tpu.core_type<tc>, window_params = [{transform_indices = @transform_0, window_bounds = array<i64: 16, 64>}, {pipeline_mode = #tpu.pipeline_mode<synchronous>, transform_indices = @transform_1, window_bounds = array<i64: 64, 128>}, {pipeline_mode = #tpu.pipeline_mode<synchronous>, transform_indices = @transform_2, window_bounds = array<i64: 1, 128>}, {pipeline_mode = #tpu.pipeline_mode<synchronous>, transform_indices = @transform_3, window_bounds = array<i64: 128, 64>}, {pipeline_mode = #tpu.pipeline_mode<synchronous>, transform_indices = @transform_4, window_bounds = array<i64: 1, 64>}, {pipeline_mode = #tpu.pipeline_mode<synchronous>, transform_indices = @transform_5, window_bounds = array<i64: 1, 64>}, {pipeline_mode = #tpu.pipeline_mode<synchronous>, transform_indices = @transform_6, window_bounds = array<i64: 1, 64>}, {transform_indices = @transform_7, window_bounds = array<i64: 16, 64>}]} {
    %c0 = arith.constant 0 : index
    %c0_0 = arith.constant 0 : index
    %0 = vector.load %arg1[%c0, %c0_0] : memref<16x64xf32, #tpu.memory_space<vmem>>, vector<16x64xf32>
    %1 = arith.truncf %0 : vector<16x64xf32> to vector<16x64xbf16>
    %c0_1 = arith.constant 0 : index
    %c0_2 = arith.constant 0 : index
    %2 = vector.load %arg2[%c0_1, %c0_2] : memref<64x128xbf16, #tpu.memory_space<vmem>>, vector<64x128xbf16>
    %cst = arith.constant dense<0.000000e+00> : vector<16x128xf32>
    %3 = tpu.matmul %1, %2, %cst {dimension_numbers = #tpu.dot_dimension_numbers<[1], [0], [0], [1], [0, 0, 1, 1], [], []>} : vector<16x64xbf16>, vector<64x128xbf16>, vector<16x128xf32> -> vector<16x128xf32>
    %c0_3 = arith.constant 0 : index
    %c0_4 = arith.constant 0 : index
    %4 = vector.load %arg3[%c0_3, %c0_4] : memref<1x128xf32, #tpu.memory_space<vmem>>, vector<1x128xf32>
    %5 = vector.broadcast %4 : vector<1x128xf32> to vector<16x128xf32>
    %6 = arith.addf %3, %5 : vector<16x128xf32>
    %cst_5 = arith.constant 0.000000e+00 : f32
    %7 = vector.broadcast %cst_5 : f32 to vector<16x128xf32>
    %8 = arith.maximumf %6, %7 : vector<16x128xf32>
    %9 = arith.truncf %8 : vector<16x128xf32> to vector<16x128xbf16>
    %c0_6 = arith.constant 0 : index
    %c0_7 = arith.constant 0 : index
    %10 = vector.load %arg4[%c0_6, %c0_7] : memref<128x64xbf16, #tpu.memory_space<vmem>>, vector<128x64xbf16>
    %cst_8 = arith.constant dense<0.000000e+00> : vector<16x64xf32>
    %11 = tpu.matmul %9, %10, %cst_8 {dimension_numbers = #tpu.dot_dimension_numbers<[1], [0], [0], [1], [0, 0, 1, 1], [], []>} : vector<16x128xbf16>, vector<128x64xbf16>, vector<16x64xf32> -> vector<16x64xf32>
    %c0_9 = arith.constant 0 : index
    %c0_10 = arith.constant 0 : index
    %12 = vector.load %arg5[%c0_9, %c0_10] : memref<1x64xf32, #tpu.memory_space<vmem>>, vector<1x64xf32>
    %13 = vector.broadcast %12 : vector<1x64xf32> to vector<16x64xf32>
    %14 = arith.addf %11, %13 : vector<16x64xf32>
    %15 = arith.addf %0, %14 : vector<16x64xf32>
    %c0_11 = arith.constant 0 : index
    %c0_12 = arith.constant 0 : index
    %16 = vector.load %arg6[%c0_11, %c0_12] : memref<1x64xf32, #tpu.memory_space<vmem>>, vector<1x64xf32>
    %c0_13 = arith.constant 0 : index
    %c0_14 = arith.constant 0 : index
    %17 = vector.load %arg7[%c0_13, %c0_14] : memref<1x64xf32, #tpu.memory_space<vmem>>, vector<1x64xf32>
    %cst_15 = arith.constant dense<0.000000e+00> : vector<16xf32>
    %18 = vector.multi_reduction <add>, %15, %cst_15 [1] : vector<16x64xf32> to vector<16xf32>
    %19 = vector.shape_cast %18 : vector<16xf32> to vector<16x1xf32>
    %cst_16 = arith.constant 6.400000e+01 : f32
    %20 = vector.broadcast %cst_16 : f32 to vector<16x1xf32>
    %21 = arith.divf %19, %20 : vector<16x1xf32>
    %22 = vector.broadcast %21 : vector<16x1xf32> to vector<16x64xf32>
    %23 = arith.subf %15, %22 : vector<16x64xf32>
    %24 = arith.mulf %23, %23 : vector<16x64xf32>
    %cst_17 = arith.constant dense<0.000000e+00> : vector<16xf32>
    %25 = vector.multi_reduction <add>, %24, %cst_17 [1] : vector<16x64xf32> to vector<16xf32>
    %26 = vector.shape_cast %25 : vector<16xf32> to vector<16x1xf32>
    %cst_18 = arith.constant 6.400000e+01 : f32
    %27 = vector.broadcast %cst_18 : f32 to vector<16x1xf32>
    %28 = arith.divf %26, %27 : vector<16x1xf32>
    %cst_19 = arith.constant 9.99999974E-6 : f32
    %29 = vector.broadcast %cst_19 : f32 to vector<16x1xf32>
    %30 = arith.addf %28, %29 : vector<16x1xf32>
    %31 = math.rsqrt %30 : vector<16x1xf32>
    %32 = vector.broadcast %31 : vector<16x1xf32> to vector<16x64xf32>
    %33 = arith.mulf %23, %32 : vector<16x64xf32>
    %34 = vector.broadcast %16 : vector<1x64xf32> to vector<16x64xf32>
    %35 = arith.mulf %33, %34 : vector<16x64xf32>
    %36 = vector.broadcast %17 : vector<1x64xf32> to vector<16x64xf32>
    %37 = arith.addf %35, %36 : vector<16x64xf32>
    %c0_20 = arith.constant 0 : index
    %c0_21 = arith.constant 0 : index
    %38 = vector.load %arg8[%c0_20, %c0_21] : memref<16x64xf32, #tpu.memory_space<vmem>>, vector<16x64xf32>
    tpu.vector_store %arg8[%c0_20, %c0_21], %37 {strides = array<i32>} : memref<16x64xf32, #tpu.memory_space<vmem>>, vector<16x64xf32>,
    return
  }
  func.func @transform_0(%arg0: i32) -> (i32, i32) {
    %c0_i32 = arith.constant 0 : i32
    %c0_i32_0 = arith.constant 0 : i32
    return %arg0, %c0_i32 : i32, i32
  }
  func.func @transform_1(%arg0: i32) -> (i32, i32) {
    %c0_i32 = arith.constant 0 : i32
    %c0_i32_0 = arith.constant 0 : i32
    %c0_i32_1 = arith.constant 0 : i32
    return %c0_i32, %c0_i32_0 : i32, i32
  }
  func.func @transform_2(%arg0: i32) -> (i32, i32) {
    %c0_i32 = arith.constant 0 : i32
    %c0_i32_0 = arith.constant 0 : i32
    %c0_i32_1 = arith.constant 0 : i32
    return %c0_i32, %c0_i32_0 : i32, i32
  }
  func.func @transform_3(%arg0: i32) -> (i32, i32) {
    %c0_i32 = arith.constant 0 : i32
    %c0_i32_0 = arith.constant 0 : i32
    %c0_i32_1 = arith.constant 0 : i32
    return %c0_i32, %c0_i32_0 : i32, i32
  }
  func.func @transform_4(%arg0: i32) -> (i32, i32) {
    %c0_i32 = arith.constant 0 : i32
    %c0_i32_0 = arith.constant 0 : i32
    %c0_i32_1 = arith.constant 0 : i32
    return %c0_i32, %c0_i32_0 : i32, i32
  }
  func.func @transform_5(%arg0: i32) -> (i32, i32) {
    %c0_i32 = arith.constant 0 : i32
    %c0_i32_0 = arith.constant 0 : i32
    %c0_i32_1 = arith.constant 0 : i32
    return %c0_i32, %c0_i32_0 : i32, i32
  }
  func.func @transform_6(%arg0: i32) -> (i32, i32) {
    %c0_i32 = arith.constant 0 : i32
    %c0_i32_0 = arith.constant 0 : i32
    %c0_i32_1 = arith.constant 0 : i32
    return %c0_i32, %c0_i32_0 : i32, i32
  }
  func.func @transform_7(%arg0: i32) -> (i32, i32) {
    %c0_i32 = arith.constant 0 : i32
    %c0_i32_0 = arith.constant 0 : i32
    return %arg0, %c0_i32 : i32, i32
  }
}

module attributes {stable_mosaic.version = 11 : i64} {
  func.func @_attn_block_kernel(%arg0: i32, %arg1: memref<1x8x64xf32, #tpu.memory_space<vmem>>, %arg2: memref<64x192xbf16, #tpu.memory_space<vmem>>, %arg3: memref<1x192xf32, #tpu.memory_space<vmem>>, %arg4: memref<64x64xbf16, #tpu.memory_space<vmem>>, %arg5: memref<1x64xf32, #tpu.memory_space<vmem>>, %arg6: memref<1x64xf32, #tpu.memory_space<vmem>>, %arg7: memref<1x64xf32, #tpu.memory_space<vmem>>, %arg8: memref<1x8x64xf32, #tpu.memory_space<vmem>>) attributes {dimension_semantics = [#tpu.dimension_semantics<parallel>], iteration_bounds = array<i64: 2>, scalar_prefetch = 0 : i64, scratch_operands = 0 : i64, tpu.core_type = #tpu.core_type<tc>, window_params = [{transform_indices = @transform_0, window_bounds = array<i64: 1, 8, 64>}, {pipeline_mode = #tpu.pipeline_mode<synchronous>, transform_indices = @transform_1, window_bounds = array<i64: 64, 192>}, {pipeline_mode = #tpu.pipeline_mode<synchronous>, transform_indices = @transform_2, window_bounds = array<i64: 1, 192>}, {pipeline_mode = #tpu.pipeline_mode<synchronous>, transform_indices = @transform_3, window_bounds = array<i64: 64, 64>}, {pipeline_mode = #tpu.pipeline_mode<synchronous>, transform_indices = @transform_4, window_bounds = array<i64: 1, 64>}, {pipeline_mode = #tpu.pipeline_mode<synchronous>, transform_indices = @transform_5, window_bounds = array<i64: 1, 64>}, {pipeline_mode = #tpu.pipeline_mode<synchronous>, transform_indices = @transform_6, window_bounds = array<i64: 1, 64>}, {transform_indices = @transform_7, window_bounds = array<i64: 1, 8, 64>}]} {
    %c0 = arith.constant 0 : index
    %c0_0 = arith.constant 0 : index
    %c0_1 = arith.constant 0 : index
    %0 = vector.load %arg1[%c0, %c0_0, %c0_1] : memref<1x8x64xf32, #tpu.memory_space<vmem>>, vector<1x8x64xf32>
    %1 = vector.shape_cast %0 : vector<1x8x64xf32> to vector<8x64xf32>
    %2 = arith.truncf %1 : vector<8x64xf32> to vector<8x64xbf16>
    %c0_2 = arith.constant 0 : index
    %c0_3 = arith.constant 0 : index
    %3 = vector.load %arg2[%c0_2, %c0_3] : memref<64x192xbf16, #tpu.memory_space<vmem>>, vector<64x192xbf16>
    %cst = arith.constant dense<0.000000e+00> : vector<8x192xf32>
    %4 = tpu.matmul %2, %3, %cst {dimension_numbers = #tpu.dot_dimension_numbers<[1], [0], [0], [1], [0, 0, 1, 1], [], []>} : vector<8x64xbf16>, vector<64x192xbf16>, vector<8x192xf32> -> vector<8x192xf32>
    %c0_4 = arith.constant 0 : index
    %c0_5 = arith.constant 0 : index
    %5 = vector.load %arg3[%c0_4, %c0_5] : memref<1x192xf32, #tpu.memory_space<vmem>>, vector<1x192xf32>
    %6 = vector.broadcast %5 : vector<1x192xf32> to vector<8x192xf32>
    %7 = arith.addf %4, %6 : vector<8x192xf32>
    %8 = vector.extract_strided_slice %7 {offsets = [0, 0], sizes = [8, 64], strides = [1, 1]} : vector<8x192xf32> to vector<8x64xf32>
    %9 = vector.extract_strided_slice %7 {offsets = [0, 64], sizes = [8, 64], strides = [1, 1]} : vector<8x192xf32> to vector<8x64xf32>
    %10 = vector.extract_strided_slice %7 {offsets = [0, 128], sizes = [8, 64], strides = [1, 1]} : vector<8x192xf32> to vector<8x64xf32>
    %11 = vector.extract_strided_slice %8 {offsets = [0, 0], sizes = [8, 16], strides = [1, 1]} : vector<8x64xf32> to vector<8x16xf32>
    %cst_6 = arith.constant 2.500000e-01 : f32
    %12 = vector.broadcast %cst_6 : f32 to vector<8x16xf32>
    %13 = arith.mulf %11, %12 : vector<8x16xf32>
    %14 = arith.truncf %13 : vector<8x16xf32> to vector<8x16xbf16>
    %15 = vector.extract_strided_slice %9 {offsets = [0, 0], sizes = [8, 16], strides = [1, 1]} : vector<8x64xf32> to vector<8x16xf32>
    %16 = arith.truncf %15 : vector<8x16xf32> to vector<8x16xbf16>
    %17 = vector.extract_strided_slice %10 {offsets = [0, 0], sizes = [8, 16], strides = [1, 1]} : vector<8x64xf32> to vector<8x16xf32>
    %18 = arith.truncf %17 : vector<8x16xf32> to vector<8x16xbf16>
    %cst_7 = arith.constant dense<0.000000e+00> : vector<8x8xf32>
    %19 = tpu.matmul %14, %16, %cst_7 {dimension_numbers = #tpu.dot_dimension_numbers<[1], [1], [0], [0], [0, 0, 1, 0], [], []>} : vector<8x16xbf16>, vector<8x16xbf16>, vector<8x8xf32> -> vector<8x8xf32>
    %cst_8 = arith.constant dense<0xFF800000> : vector<8xf32>
    %20 = vector.multi_reduction <maximumf>, %19, %cst_8 [1] : vector<8x8xf32> to vector<8xf32>
    %21 = vector.shape_cast %20 : vector<8xf32> to vector<8x1xf32>
    %22 = vector.broadcast %21 : vector<8x1xf32> to vector<8x8xf32>
    %23 = arith.subf %19, %22 : vector<8x8xf32>
    %24 = math.exp %23 : vector<8x8xf32>
    %cst_9 = arith.constant dense<0.000000e+00> : vector<8xf32>
    %25 = vector.multi_reduction <add>, %24, %cst_9 [1] : vector<8x8xf32> to vector<8xf32>
    %26 = vector.shape_cast %25 : vector<8xf32> to vector<8x1xf32>
    %27 = tpu.reciprocal %26 {approx = true} : vector<8x1xf32> -> vector<8x1xf32>
    %28 = vector.broadcast %27 : vector<8x1xf32> to vector<8x8xf32>
    %29 = arith.mulf %24, %28 : vector<8x8xf32>
    %30 = arith.truncf %29 : vector<8x8xf32> to vector<8x8xbf16>
    %cst_10 = arith.constant dense<0.000000e+00> : vector<8x16xf32>
    %31 = tpu.matmul %30, %18, %cst_10 {dimension_numbers = #tpu.dot_dimension_numbers<[1], [0], [0], [1], [0, 0, 1, 1], [], []>} : vector<8x8xbf16>, vector<8x16xbf16>, vector<8x16xf32> -> vector<8x16xf32>
    %32 = vector.extract_strided_slice %8 {offsets = [0, 16], sizes = [8, 16], strides = [1, 1]} : vector<8x64xf32> to vector<8x16xf32>
    %cst_11 = arith.constant 2.500000e-01 : f32
    %33 = vector.broadcast %cst_11 : f32 to vector<8x16xf32>
    %34 = arith.mulf %32, %33 : vector<8x16xf32>
    %35 = arith.truncf %34 : vector<8x16xf32> to vector<8x16xbf16>
    %36 = vector.extract_strided_slice %9 {offsets = [0, 16], sizes = [8, 16], strides = [1, 1]} : vector<8x64xf32> to vector<8x16xf32>
    %37 = arith.truncf %36 : vector<8x16xf32> to vector<8x16xbf16>
    %38 = vector.extract_strided_slice %10 {offsets = [0, 16], sizes = [8, 16], strides = [1, 1]} : vector<8x64xf32> to vector<8x16xf32>
    %39 = arith.truncf %38 : vector<8x16xf32> to vector<8x16xbf16>
    %cst_12 = arith.constant dense<0.000000e+00> : vector<8x8xf32>
    %40 = tpu.matmul %35, %37, %cst_12 {dimension_numbers = #tpu.dot_dimension_numbers<[1], [1], [0], [0], [0, 0, 1, 0], [], []>} : vector<8x16xbf16>, vector<8x16xbf16>, vector<8x8xf32> -> vector<8x8xf32>
    %cst_13 = arith.constant dense<0xFF800000> : vector<8xf32>
    %41 = vector.multi_reduction <maximumf>, %40, %cst_13 [1] : vector<8x8xf32> to vector<8xf32>
    %42 = vector.shape_cast %41 : vector<8xf32> to vector<8x1xf32>
    %43 = vector.broadcast %42 : vector<8x1xf32> to vector<8x8xf32>
    %44 = arith.subf %40, %43 : vector<8x8xf32>
    %45 = math.exp %44 : vector<8x8xf32>
    %cst_14 = arith.constant dense<0.000000e+00> : vector<8xf32>
    %46 = vector.multi_reduction <add>, %45, %cst_14 [1] : vector<8x8xf32> to vector<8xf32>
    %47 = vector.shape_cast %46 : vector<8xf32> to vector<8x1xf32>
    %48 = tpu.reciprocal %47 {approx = true} : vector<8x1xf32> -> vector<8x1xf32>
    %49 = vector.broadcast %48 : vector<8x1xf32> to vector<8x8xf32>
    %50 = arith.mulf %45, %49 : vector<8x8xf32>
    %51 = arith.truncf %50 : vector<8x8xf32> to vector<8x8xbf16>
    %cst_15 = arith.constant dense<0.000000e+00> : vector<8x16xf32>
    %52 = tpu.matmul %51, %39, %cst_15 {dimension_numbers = #tpu.dot_dimension_numbers<[1], [0], [0], [1], [0, 0, 1, 1], [], []>} : vector<8x8xbf16>, vector<8x16xbf16>, vector<8x16xf32> -> vector<8x16xf32>
    %53 = vector.extract_strided_slice %8 {offsets = [0, 32], sizes = [8, 16], strides = [1, 1]} : vector<8x64xf32> to vector<8x16xf32>
    %cst_16 = arith.constant 2.500000e-01 : f32
    %54 = vector.broadcast %cst_16 : f32 to vector<8x16xf32>
    %55 = arith.mulf %53, %54 : vector<8x16xf32>
    %56 = arith.truncf %55 : vector<8x16xf32> to vector<8x16xbf16>
    %57 = vector.extract_strided_slice %9 {offsets = [0, 32], sizes = [8, 16], strides = [1, 1]} : vector<8x64xf32> to vector<8x16xf32>
    %58 = arith.truncf %57 : vector<8x16xf32> to vector<8x16xbf16>
    %59 = vector.extract_strided_slice %10 {offsets = [0, 32], sizes = [8, 16], strides = [1, 1]} : vector<8x64xf32> to vector<8x16xf32>
    %60 = arith.truncf %59 : vector<8x16xf32> to vector<8x16xbf16>
    %cst_17 = arith.constant dense<0.000000e+00> : vector<8x8xf32>
    %61 = tpu.matmul %56, %58, %cst_17 {dimension_numbers = #tpu.dot_dimension_numbers<[1], [1], [0], [0], [0, 0, 1, 0], [], []>} : vector<8x16xbf16>, vector<8x16xbf16>, vector<8x8xf32> -> vector<8x8xf32>
    %cst_18 = arith.constant dense<0xFF800000> : vector<8xf32>
    %62 = vector.multi_reduction <maximumf>, %61, %cst_18 [1] : vector<8x8xf32> to vector<8xf32>
    %63 = vector.shape_cast %62 : vector<8xf32> to vector<8x1xf32>
    %64 = vector.broadcast %63 : vector<8x1xf32> to vector<8x8xf32>
    %65 = arith.subf %61, %64 : vector<8x8xf32>
    %66 = math.exp %65 : vector<8x8xf32>
    %cst_19 = arith.constant dense<0.000000e+00> : vector<8xf32>
    %67 = vector.multi_reduction <add>, %66, %cst_19 [1] : vector<8x8xf32> to vector<8xf32>
    %68 = vector.shape_cast %67 : vector<8xf32> to vector<8x1xf32>
    %69 = tpu.reciprocal %68 {approx = true} : vector<8x1xf32> -> vector<8x1xf32>
    %70 = vector.broadcast %69 : vector<8x1xf32> to vector<8x8xf32>
    %71 = arith.mulf %66, %70 : vector<8x8xf32>
    %72 = arith.truncf %71 : vector<8x8xf32> to vector<8x8xbf16>
    %cst_20 = arith.constant dense<0.000000e+00> : vector<8x16xf32>
    %73 = tpu.matmul %72, %60, %cst_20 {dimension_numbers = #tpu.dot_dimension_numbers<[1], [0], [0], [1], [0, 0, 1, 1], [], []>} : vector<8x8xbf16>, vector<8x16xbf16>, vector<8x16xf32> -> vector<8x16xf32>
    %74 = vector.extract_strided_slice %8 {offsets = [0, 48], sizes = [8, 16], strides = [1, 1]} : vector<8x64xf32> to vector<8x16xf32>
    %cst_21 = arith.constant 2.500000e-01 : f32
    %75 = vector.broadcast %cst_21 : f32 to vector<8x16xf32>
    %76 = arith.mulf %74, %75 : vector<8x16xf32>
    %77 = arith.truncf %76 : vector<8x16xf32> to vector<8x16xbf16>
    %78 = vector.extract_strided_slice %9 {offsets = [0, 48], sizes = [8, 16], strides = [1, 1]} : vector<8x64xf32> to vector<8x16xf32>
    %79 = arith.truncf %78 : vector<8x16xf32> to vector<8x16xbf16>
    %80 = vector.extract_strided_slice %10 {offsets = [0, 48], sizes = [8, 16], strides = [1, 1]} : vector<8x64xf32> to vector<8x16xf32>
    %81 = arith.truncf %80 : vector<8x16xf32> to vector<8x16xbf16>
    %cst_22 = arith.constant dense<0.000000e+00> : vector<8x8xf32>
    %82 = tpu.matmul %77, %79, %cst_22 {dimension_numbers = #tpu.dot_dimension_numbers<[1], [1], [0], [0], [0, 0, 1, 0], [], []>} : vector<8x16xbf16>, vector<8x16xbf16>, vector<8x8xf32> -> vector<8x8xf32>
    %cst_23 = arith.constant dense<0xFF800000> : vector<8xf32>
    %83 = vector.multi_reduction <maximumf>, %82, %cst_23 [1] : vector<8x8xf32> to vector<8xf32>
    %84 = vector.shape_cast %83 : vector<8xf32> to vector<8x1xf32>
    %85 = vector.broadcast %84 : vector<8x1xf32> to vector<8x8xf32>
    %86 = arith.subf %82, %85 : vector<8x8xf32>
    %87 = math.exp %86 : vector<8x8xf32>
    %cst_24 = arith.constant dense<0.000000e+00> : vector<8xf32>
    %88 = vector.multi_reduction <add>, %87, %cst_24 [1] : vector<8x8xf32> to vector<8xf32>
    %89 = vector.shape_cast %88 : vector<8xf32> to vector<8x1xf32>
    %90 = tpu.reciprocal %89 {approx = true} : vector<8x1xf32> -> vector<8x1xf32>
    %91 = vector.broadcast %90 : vector<8x1xf32> to vector<8x8xf32>
    %92 = arith.mulf %87, %91 : vector<8x8xf32>
    %93 = arith.truncf %92 : vector<8x8xf32> to vector<8x8xbf16>
    %cst_25 = arith.constant dense<0.000000e+00> : vector<8x16xf32>
    %94 = tpu.matmul %93, %81, %cst_25 {dimension_numbers = #tpu.dot_dimension_numbers<[1], [0], [0], [1], [0, 0, 1, 1], [], []>} : vector<8x8xbf16>, vector<8x16xbf16>, vector<8x16xf32> -> vector<8x16xf32>
    %95 = tpu.concatenate %31, %52, %73, %94 in 1 : vector<8x16xf32>, vector<8x16xf32>, vector<8x16xf32>, vector<8x16xf32> -> vector<8x64xf32>
    %96 = arith.truncf %95 : vector<8x64xf32> to vector<8x64xbf16>
    %c0_26 = arith.constant 0 : index
    %c0_27 = arith.constant 0 : index
    %97 = vector.load %arg4[%c0_26, %c0_27] : memref<64x64xbf16, #tpu.memory_space<vmem>>, vector<64x64xbf16>
    %cst_28 = arith.constant dense<0.000000e+00> : vector<8x64xf32>
    %98 = tpu.matmul %96, %97, %cst_28 {dimension_numbers = #tpu.dot_dimension_numbers<[1], [0], [0], [1], [0, 0, 1, 1], [], []>} : vector<8x64xbf16>, vector<64x64xbf16>, vector<8x64xf32> -> vector<8x64xf32>
    %c0_29 = arith.constant 0 : index
    %c0_30 = arith.constant 0 : index
    %99 = vector.load %arg5[%c0_29, %c0_30] : memref<1x64xf32, #tpu.memory_space<vmem>>, vector<1x64xf32>
    %100 = vector.broadcast %99 : vector<1x64xf32> to vector<8x64xf32>
    %101 = arith.addf %98, %100 : vector<8x64xf32>
    %102 = arith.addf %1, %101 : vector<8x64xf32>
    %c0_31 = arith.constant 0 : index
    %c0_32 = arith.constant 0 : index
    %103 = vector.load %arg6[%c0_31, %c0_32] : memref<1x64xf32, #tpu.memory_space<vmem>>, vector<1x64xf32>
    %c0_33 = arith.constant 0 : index
    %c0_34 = arith.constant 0 : index
    %104 = vector.load %arg7[%c0_33, %c0_34] : memref<1x64xf32, #tpu.memory_space<vmem>>, vector<1x64xf32>
    %cst_35 = arith.constant dense<0.000000e+00> : vector<8xf32>
    %105 = vector.multi_reduction <add>, %102, %cst_35 [1] : vector<8x64xf32> to vector<8xf32>
    %106 = vector.shape_cast %105 : vector<8xf32> to vector<8x1xf32>
    %cst_36 = arith.constant 6.400000e+01 : f32
    %107 = vector.broadcast %cst_36 : f32 to vector<8x1xf32>
    %108 = arith.divf %106, %107 : vector<8x1xf32>
    %109 = vector.broadcast %108 : vector<8x1xf32> to vector<8x64xf32>
    %110 = arith.subf %102, %109 : vector<8x64xf32>
    %111 = arith.mulf %110, %110 : vector<8x64xf32>
    %cst_37 = arith.constant dense<0.000000e+00> : vector<8xf32>
    %112 = vector.multi_reduction <add>, %111, %cst_37 [1] : vector<8x64xf32> to vector<8xf32>
    %113 = vector.shape_cast %112 : vector<8xf32> to vector<8x1xf32>
    %cst_38 = arith.constant 6.400000e+01 : f32
    %114 = vector.broadcast %cst_38 : f32 to vector<8x1xf32>
    %115 = arith.divf %113, %114 : vector<8x1xf32>
    %cst_39 = arith.constant 9.99999974E-6 : f32
    %116 = vector.broadcast %cst_39 : f32 to vector<8x1xf32>
    %117 = arith.addf %115, %116 : vector<8x1xf32>
    %118 = math.rsqrt %117 : vector<8x1xf32>
    %119 = vector.broadcast %118 : vector<8x1xf32> to vector<8x64xf32>
    %120 = arith.mulf %110, %119 : vector<8x64xf32>
    %121 = vector.broadcast %103 : vector<1x64xf32> to vector<8x64xf32>
    %122 = arith.mulf %120, %121 : vector<8x64xf32>
    %123 = vector.broadcast %104 : vector<1x64xf32> to vector<8x64xf32>
    %124 = arith.addf %122, %123 : vector<8x64xf32>
    %c0_40 = arith.constant 0 : index
    %c0_41 = arith.constant 0 : index
    %c0_42 = arith.constant 0 : index
    %125 = vector.load %arg8[%c0_40, %c0_41, %c0_42] : memref<1x8x64xf32, #tpu.memory_space<vmem>>, vector<1x8x64xf32>
    %126 = vector.shape_cast %125 : vector<1x8x64xf32> to vector<8x64xf32>
    %127 = vector.shape_cast %124 : vector<8x64xf32> to vector<1x8x64xf32>
    tpu.vector_store %arg8[%c0_40, %c0_41, %c0_42], %127 {strides = array<i32>} : memref<1x8x64xf32, #tpu.memory_space<vmem>>, vector<1x8x64xf32>,
    return
  }
  func.func @transform_0(%arg0: i32) -> (i32, i32, i32) {
    %c0_i32 = arith.constant 0 : i32
    %c0_i32_0 = arith.constant 0 : i32
    %c0_i32_1 = arith.constant 0 : i32
    return %arg0, %c0_i32, %c0_i32_0 : i32, i32, i32
  }
  func.func @transform_1(%arg0: i32) -> (i32, i32) {
    %c0_i32 = arith.constant 0 : i32
    %c0_i32_0 = arith.constant 0 : i32
    %c0_i32_1 = arith.constant 0 : i32
    return %c0_i32, %c0_i32_0 : i32, i32
  }
  func.func @transform_2(%arg0: i32) -> (i32, i32) {
    %c0_i32 = arith.constant 0 : i32
    %c0_i32_0 = arith.constant 0 : i32
    %c0_i32_1 = arith.constant 0 : i32
    return %c0_i32, %c0_i32_0 : i32, i32
  }
  func.func @transform_3(%arg0: i32) -> (i32, i32) {
    %c0_i32 = arith.constant 0 : i32
    %c0_i32_0 = arith.constant 0 : i32
    %c0_i32_1 = arith.constant 0 : i32
    return %c0_i32, %c0_i32_0 : i32, i32
  }
  func.func @transform_4(%arg0: i32) -> (i32, i32) {
    %c0_i32 = arith.constant 0 : i32
    %c0_i32_0 = arith.constant 0 : i32
    %c0_i32_1 = arith.constant 0 : i32
    return %c0_i32, %c0_i32_0 : i32, i32
  }
  func.func @transform_5(%arg0: i32) -> (i32, i32) {
    %c0_i32 = arith.constant 0 : i32
    %c0_i32_0 = arith.constant 0 : i32
    %c0_i32_1 = arith.constant 0 : i32
    return %c0_i32, %c0_i32_0 : i32, i32
  }
  func.func @transform_6(%arg0: i32) -> (i32, i32) {
    %c0_i32 = arith.constant 0 : i32
    %c0_i32_0 = arith.constant 0 : i32
    %c0_i32_1 = arith.constant 0 : i32
    return %c0_i32, %c0_i32_0 : i32, i32
  }
  func.func @transform_7(%arg0: i32) -> (i32, i32, i32) {
    %c0_i32 = arith.constant 0 : i32
    %c0_i32_0 = arith.constant 0 : i32
    %c0_i32_1 = arith.constant 0 : i32
    return %arg0, %c0_i32, %c0_i32_0 : i32, i32, i32
  }
}

module attributes {stable_mosaic.version = 11 : i64} {
  func.func @_linear_kernel(%arg0: i32, %arg1: i32, %arg2: i32, %arg3: memref<16x64xf32, #tpu.memory_space<vmem>>, %arg4: memref<64x64xbf16, #tpu.memory_space<vmem>>, %arg5: memref<1x64xf32, #tpu.memory_space<vmem>>, %arg6: memref<16x64xf32, #tpu.memory_space<vmem>>, %arg7: memref<16x64xf32, #tpu.memory_space<vmem>>) attributes {dimension_semantics = [#tpu.dimension_semantics<parallel>, #tpu.dimension_semantics<parallel>, #tpu.dimension_semantics<arbitrary>], iteration_bounds = array<i64: 1, 1, 1>, scalar_prefetch = 0 : i64, scratch_operands = 1 : i64, tpu.core_type = #tpu.core_type<tc>, window_params = [{transform_indices = @transform_0, window_bounds = array<i64: 16, 64>}, {transform_indices = @transform_1, window_bounds = array<i64: 64, 64>}, {transform_indices = @transform_2, window_bounds = array<i64: 1, 64>}, {transform_indices = @transform_3, window_bounds = array<i64: 16, 64>}]} {
    %c0_i32 = arith.constant 0 : i32
    %0 = arith.cmpi eq, %arg2, %c0_i32 : i32
    %1 = arith.extui %0 : i1 to i32
    %c0_i32_0 = arith.constant 0 : i32
    %2 = arith.cmpi ne, %1, %c0_i32_0 : i32
    scf.if %2 {
      %cst_10 = arith.constant 0.000000e+00 : f32
      %13 = vector.broadcast %cst_10 : f32 to vector<16x64xf32>
      %c0_11 = arith.constant 0 : index
      %c0_12 = arith.constant 0 : index
      %14 = vector.load %arg7[%c0_11, %c0_12] : memref<16x64xf32, #tpu.memory_space<vmem>>, vector<16x64xf32>
      tpu.vector_store %arg7[%c0_11, %c0_12], %13 {strides = array<i32>} : memref<16x64xf32, #tpu.memory_space<vmem>>, vector<16x64xf32>,
    } else {
    }
    %c0 = arith.constant 0 : index
    %c0_1 = arith.constant 0 : index
    %3 = vector.load %arg7[%c0, %c0_1] : memref<16x64xf32, #tpu.memory_space<vmem>>, vector<16x64xf32>
    %c0_2 = arith.constant 0 : index
    %c0_3 = arith.constant 0 : index
    %4 = vector.load %arg3[%c0_2, %c0_3] : memref<16x64xf32, #tpu.memory_space<vmem>>, vector<16x64xf32>
    %5 = arith.truncf %4 : vector<16x64xf32> to vector<16x64xbf16>
    %c0_4 = arith.constant 0 : index
    %c0_5 = arith.constant 0 : index
    %6 = vector.load %arg4[%c0_4, %c0_5] : memref<64x64xbf16, #tpu.memory_space<vmem>>, vector<64x64xbf16>
    %cst = arith.constant dense<0.000000e+00> : vector<16x64xf32>
    %7 = tpu.matmul %5, %6, %cst {dimension_numbers = #tpu.dot_dimension_numbers<[1], [0], [0], [1], [0, 0, 1, 1], [], []>} : vector<16x64xbf16>, vector<64x64xbf16>, vector<16x64xf32> -> vector<16x64xf32>
    %8 = arith.addf %3, %7 : vector<16x64xf32>
    %c0_6 = arith.constant 0 : index
    %c0_7 = arith.constant 0 : index
    %9 = vector.load %arg7[%c0_6, %c0_7] : memref<16x64xf32, #tpu.memory_space<vmem>>, vector<16x64xf32>
    tpu.vector_store %arg7[%c0_6, %c0_7], %8 {strides = array<i32>} : memref<16x64xf32, #tpu.memory_space<vmem>>, vector<16x64xf32>,
    %c0_i32_8 = arith.constant 0 : i32
    %10 = arith.cmpi eq, %arg2, %c0_i32_8 : i32
    %11 = arith.extui %10 : i1 to i32
    %c0_i32_9 = arith.constant 0 : i32
    %12 = arith.cmpi ne, %11, %c0_i32_9 : i32
    scf.if %12 {
      %c0_10 = arith.constant 0 : index
      %c0_11 = arith.constant 0 : index
      %13 = vector.load %arg7[%c0_10, %c0_11] : memref<16x64xf32, #tpu.memory_space<vmem>>, vector<16x64xf32>
      %c0_12 = arith.constant 0 : index
      %c0_13 = arith.constant 0 : index
      %14 = vector.load %arg5[%c0_12, %c0_13] : memref<1x64xf32, #tpu.memory_space<vmem>>, vector<1x64xf32>
      %15 = vector.broadcast %14 : vector<1x64xf32> to vector<16x64xf32>
      %16 = arith.addf %13, %15 : vector<16x64xf32>
      %c0_14 = arith.constant 0 : index
      %c0_15 = arith.constant 0 : index
      %17 = vector.load %arg6[%c0_14, %c0_15] : memref<16x64xf32, #tpu.memory_space<vmem>>, vector<16x64xf32>
      tpu.vector_store %arg6[%c0_14, %c0_15], %16 {strides = array<i32>} : memref<16x64xf32, #tpu.memory_space<vmem>>, vector<16x64xf32>,
    } else {
    }
    return
  }
  func.func @transform_0(%arg0: i32, %arg1: i32, %arg2: i32) -> (i32, i32) {
    %c0_i32 = arith.constant 0 : i32
    return %arg0, %arg2 : i32, i32
  }
  func.func @transform_1(%arg0: i32, %arg1: i32, %arg2: i32) -> (i32, i32) {
    %c0_i32 = arith.constant 0 : i32
    return %arg2, %arg1 : i32, i32
  }
  func.func @transform_2(%arg0: i32, %arg1: i32, %arg2: i32) -> (i32, i32) {
    %c0_i32 = arith.constant 0 : i32
    %c0_i32_0 = arith.constant 0 : i32
    return %c0_i32, %arg1 : i32, i32
  }
  func.func @transform_3(%arg0: i32, %arg1: i32, %arg2: i32) -> (i32, i32) {
    %c0_i32 = arith.constant 0 : i32
    return %arg0, %arg1 : i32, i32
  }
}

</mosaic_0001>

<llo_original>
// kernel: transformer_model.6
$region0: #{transformer_model.6}
  #allocation0 [shape = 'u32[]', space=smem, size = 0x4, offset = 0x4, fixed_abs, tag = 'smem constant byte address 0x4 - core index']
  #allocation1 [shape = 'u32[144,128]{1,0:T(1,128)}', space=vmem, size = 0x12000, scoped, tag = 'internal scratch']
  #allocation2 [shape = 'f32[16,64]{1,0:T(8,128)}', space=vmem, size = 0x2000, scoped, tag = 'scratch operand']
  %s0 = inlined_call_operand.hbm [shape: f32[16,64], index: 0, kind: input, shape index: {}]
  %s1 = inlined_call_operand.vmem [shape: bf16[64,64], index: 1, kind: input, shape index: {}]
  %s2 = inlined_call_operand.vmem [shape: f32[1,64], index: 2, kind: input, shape index: {}]
  %s3 = inlined_call_operand.vmem [shape: f32[16,64], index: 3, kind: output, shape index: {}]
  %s4 = sld [smem:[#allocation0]]
  $region34: #{transformer_model.6} parent=0
    _
  %s6 = ssub.s32 1, %s4
  %s7 = scalar_select 0, %s6, %s4
  $region1: #{transformer_model.6} parent=0
    #allocation3 [shape = 'u8[8192]{0}', space=vmem, size = 0x2000, scoped, tag = 'input window, operand 0, single buffered']
    #allocation4 [shape = 's32[1]{0}', space=sflag, size = 0x4, scoped, tag = 'scoped memory for transformer_model.6']
    %8 = vsyncpa [#allocation4], 0
    // Predicated region
    $region2: #{transformer_model.6} parent=1 // pred_check
      _
    $region3: #{transformer_model.6} parent=1 // pred_check_branch
      %10 = sbr.rel (0) target = $region5
    $region4: #{transformer_model.6} parent=1 // pred_region
      %s12 = ssub.s32 256, 256
      %13 = vsyncadd [#allocation4], %s12
      %s14 = sshll.u32 [#allocation3], 4
      %s15 = int_to_ptr.vmem [resolvable:$true] %s14
      %20 = dma.hbm_to_vmem [thread:$0]  %s0, 256, %s15, [#allocation4], 128, 128, 8
    $region5: #{transformer_model.6} parent=1 // pred_fallthru
      _
    // Predicated region
    $region6: #{transformer_model.6} parent=1 // pred_check
      _
    $region7: #{transformer_model.6} parent=1 // pred_check_branch
      %22 = sbr.rel (0) target = $region9
    $region8: #{transformer_model.6} parent=1 // pred_region
      _
    $region9: #{transformer_model.6} parent=1 // pred_fallthru
      _
    // Predicated region
    $region10: #{transformer_model.6} parent=1 // pred_check
      _
    $region11: #{transformer_model.6} parent=1 // pred_check_branch
      %24 = sbr.rel (0) target = $region13
    $region12: #{transformer_model.6} parent=1 // pred_region
      _
    $region13: #{transformer_model.6} parent=1 // pred_fallthru
      _
    // Predicated region
    $region14: #{transformer_model.6} parent=1 // pred_check
      _
    $region15: #{transformer_model.6} parent=1 // pred_check_branch
      %26 = sbr.rel (0) target = $region17
    $region16: #{transformer_model.6} parent=1 // pred_region
      %27 = dma.done [#allocation4], 256
    $region17: #{transformer_model.6} parent=1 // pred_fallthru
      _
    %p29 = scmp.eq.s32.totalorder 0, 0
    // Predicated region
    $region18: #{transformer_model.6} parent=1 // pred_check
      %p30 = pneg %p29
    $region19: #{transformer_model.6} parent=1 // pred_check_branch
      %32 = sbr.rel (%p30) target = $region21
    $region20: #{transformer_model.6} parent=1 // pred_region
      %vm33 = vcmask 523264
      %34 = vst.msk [vmem:[#allocation2] sm:$0xff] %vm33, 0.0
      %35 = vst.msk [vmem:[#allocation2 + $0x8] sm:$0xff] %vm33, 0.0
    $region21: #{transformer_model.6} parent=1 // pred_fallthru
      _
    %v36 = vld [vmem:[#allocation2] sm:$0xff]
    %v37 = vld [vmem:[#allocation2 + $0x8] sm:$0xff]
    %v38 = vld [vmem:[#allocation3] sm:$0xff]
    %v39 = vld [vmem:[#allocation3 + $0x8] sm:$0xff]
    %v40 = vpack.c.bf16 %v39, %v38
    %v41 = vld [vmem:[%s1] sm:$0xf]
    %v42 = vld [vmem:[%s1 + $0x4] sm:$0xf]
    %v43 = vld [vmem:[%s1 + $0x8] sm:$0xf]
    %v44 = vld [vmem:[%s1 + $0xc] sm:$0xf]
    %v45 = vld [vmem:[%s1 + $0x10] sm:$0xf]
    %v46 = vld [vmem:[%s1 + $0x14] sm:$0xf]
    %v47 = vld [vmem:[%s1 + $0x18] sm:$0xf]
    %v48 = vld [vmem:[%s1 + $0x1c] sm:$0xf]
    %v57 = vunpack.c.l.b16 %v41
    %v58 = vunpack.c.l.b16 %v42
    %v59 = vunpack.c.l.b16 %v43
    %v60 = vunpack.c.l.b16 %v44
    %v61 = vunpack.c.l.b16 %v45
    %v62 = vunpack.c.l.b16 %v46
    %v63 = vunpack.c.l.b16 %v47
    %v64 = vunpack.c.l.b16 %v48
    %v65 = vpack.c.b16 %v58, %v57
    %v66 = vpack.c.b16 %v60, %v59
    %v67 = vpack.c.b16 %v62, %v61
    %v68 = vpack.c.b16 %v64, %v63
    %vm73 = vcmask 523264
    %v75 = vsel %vm73, %v40, 0
    %77 = vmatprep.subr.bf16.mxu0 0
    %78 = vmatpush1.bf16.msra.mxu0 %v65
    %79 = vmatprep.subr.bf16.mxu0 0
    %80 = vmatpush1.bf16.msra.mxu0 %v66
    %81 = vmatprep.subr.bf16.mxu0 0
    %82 = vmatpush1.bf16.msra.mxu0 %v67
    %83 = vmatprep.subr.bf16.mxu0 0
    %84 = vmatpush1.bf16.msra.mxu0 %v68
    %85 = vmatprep.subr.bf16.mxu0 0
    %86 = vmatpush1.bf16.msra.mxu0 0
    %87 = vmatprep.subr.bf16.mxu0 0
    %88 = vmatpush1.bf16.msra.mxu0 0
    %89 = vmatprep.subr.bf16.mxu0 0
    %90 = vmatpush1.bf16.msra.mxu0 0
    %91 = vmatprep.subr.bf16.mxu0 0
    %92 = vmatpush1.bf16.msra.mxu0 0
    %93 = vmatprep.subr.bf16.mxu0 0
    %94 = vmatpush1.bf16.msra.mxu0 0
    %95 = vmatprep.subr.bf16.mxu0 0
    %96 = vmatpush1.bf16.msra.mxu0 0
    %97 = vmatprep.subr.bf16.mxu0 0
    %98 = vmatpush1.bf16.msra.mxu0 0
    %99 = vmatprep.subr.bf16.mxu0 0
    %100 = vmatpush1.bf16.msra.mxu0 0
    %101 = vmatprep.subr.bf16.mxu0 0
    %102 = vmatpush1.bf16.msra.mxu0 0
    %103 = vmatprep.subr.bf16.mxu0 0
    %104 = vmatpush1.bf16.msra.mxu0 0
    %105 = vmatprep.subr.bf16.mxu0 0
    %106 = vmatpush1.bf16.msra.mxu0 0
    %107 = vmatprep.subr.bf16.mxu0 0
    %108 = vmatpush1.bf16.msra.mxu0 0
    %109 = vmatprep.mubr.bf16.mxu0 0
    %110 = vmatmul.mubr.bf16.gmra.mrb[0].mxu0 %v75
    %v111 = vpop.f32.mrb[0].mxu0
    %v112 = vadd.f32 0.0, %v111
    %v113 = vpop.f32.mrb[0].mxu0
    %v114 = vpop.f32.mrb[0].mxu0
    %v115 = vadd.f32 0.0, %v114
    %v116 = vpop.f32.mrb[0].mxu0
    %117 = vdwg.mxu0
    %v118 = vadd.f32 %v36, %v112
    %v119 = vadd.f32 %v37, %v115
    %120 = vst.msk [vmem:[#allocation2] sm:$0xff] %vm73, %v118
    %121 = vst.msk [vmem:[#allocation2 + $0x8] sm:$0xff] %vm73, %v119
    // Predicated region
    $region22: #{transformer_model.6} parent=1 // pred_check
      %p122 = pneg %p29
    $region23: #{transformer_model.6} parent=1 // pred_check_branch
      %124 = sbr.rel (%p122) target = $region25
    $region24: #{transformer_model.6} parent=1 // pred_region
      %v125 = vld [vmem:[#allocation2] sm:$0xff]
      %v126 = vld [vmem:[#allocation2 + $0x8] sm:$0xff]
      %v127 = vld [vmem:[%s2] sm:$0x1]
      %v129 = vlaneseq
      %v130 = vshrl.u32 %v129, 7
      %v131 = vsub.s32 0, %v130
      %v132 = vrot.slane %v127, %v131
      %v134 = vadd.f32 %v125, %v132
      %v135 = vadd.f32 %v126, %v132
      %136 = vst.msk [vmem:[%s3] sm:$0xff] %vm73, %v134
      %137 = vst.msk [vmem:[%s3 + $0x8] sm:$0xff] %vm73, %v135
    $region25: #{transformer_model.6} parent=1 // pred_fallthru
      _
    // Predicated region
    $region26: #{transformer_model.6} parent=1 // pred_check
      _
    $region27: #{transformer_model.6} parent=1 // pred_check_branch
      %139 = sbr.rel (0) target = $region29
    $region28: #{transformer_model.6} parent=1 // pred_region
      _
    $region29: #{transformer_model.6} parent=1 // pred_fallthru
      _
    // Predicated region
    $region30: #{transformer_model.6} parent=1 // pred_check
      _
    $region31: #{transformer_model.6} parent=1 // pred_check_branch
      %141 = sbr.rel (0) target = $region33
    $region32: #{transformer_model.6} parent=1 // pred_region
      _
    $region33: #{transformer_model.6} parent=1 // pred_fallthru
      _
    %142 = vsyncpa [#allocation4], 1

// kernel: transformer_model.8
$region0: #{transformer_model.8}
  #allocation0 [shape = 'u32[]', space=smem, size = 0x4, offset = 0x4, fixed_abs, tag = 'smem constant byte address 0x4 - core index']
  #allocation1 [shape = 'u32[144,128]{1,0:T(1,128)}', space=vmem, size = 0x12000, scoped, tag = 'internal scratch']
  %s0 = inlined_call_operand.vmem [shape: f32[16,64], index: 0, kind: input, shape index: {}]
  %s1 = inlined_call_operand.vmem [shape: bf16[64,128], index: 1, kind: input, shape index: {}]
  %s2 = inlined_call_operand.vmem [shape: f32[1,128], index: 2, kind: input, shape index: {}]
  %s3 = inlined_call_operand.vmem [shape: bf16[128,64], index: 3, kind: input, shape index: {}]
  %s4 = inlined_call_operand.vmem [shape: f32[1,64], index: 4, kind: input, shape index: {}]
  %s5 = inlined_call_operand.vmem [shape: f32[1,64], index: 5, kind: input, shape index: {}]
  %s6 = inlined_call_operand.vmem [shape: f32[1,64], index: 6, kind: input, shape index: {}]
  %s7 = inlined_call_operand.vmem [shape: f32[16,64], index: 7, kind: output, shape index: {}]
  %s8 = sld [smem:[#allocation0]]
  $region38: #{transformer_model.8} parent=0
    _
  %s10 = ssub.s32 1, %s8
  %s11 = scalar_select 0, %s10, %s8
  // Predicated region
  $region2: #{transformer_model.8} parent=0 // pred_check
    _
  $region3: #{transformer_model.8} parent=0 // pred_check_branch
    %13 = sbr.rel (0) target = $region5
  $region4: #{transformer_model.8} parent=0 // pred_region
    _
  $region5: #{transformer_model.8} parent=0 // pred_fallthru
    _
  // Predicated region
  $region6: #{transformer_model.8} parent=0 // pred_check
    _
  $region7: #{transformer_model.8} parent=0 // pred_check_branch
    %15 = sbr.rel (0) target = $region9
  $region8: #{transformer_model.8} parent=0 // pred_region
    _
  $region9: #{transformer_model.8} parent=0 // pred_fallthru
    _
  // Predicated region
  $region10: #{transformer_model.8} parent=0 // pred_check
    _
  $region11: #{transformer_model.8} parent=0 // pred_check_branch
    %17 = sbr.rel (0) target = $region13
  $region12: #{transformer_model.8} parent=0 // pred_region
    _
  $region13: #{transformer_model.8} parent=0 // pred_fallthru
    _
  // Predicated region
  $region14: #{transformer_model.8} parent=0 // pred_check
    _
  $region15: #{transformer_model.8} parent=0 // pred_check_branch
    %19 = sbr.rel (0) target = $region17
  $region16: #{transformer_model.8} parent=0 // pred_region
    _
  $region17: #{transformer_model.8} parent=0 // pred_fallthru
    _
  // Predicated region
  $region18: #{transformer_model.8} parent=0 // pred_check
    _
  $region19: #{transformer_model.8} parent=0 // pred_check_branch
    %21 = sbr.rel (0) target = $region21
  $region20: #{transformer_model.8} parent=0 // pred_region
    _
  $region21: #{transformer_model.8} parent=0 // pred_fallthru
    _
  // Predicated region
  $region22: #{transformer_model.8} parent=0 // pred_check
    _
  $region23: #{transformer_model.8} parent=0 // pred_check_branch
    %23 = sbr.rel (0) target = $region25
  $region24: #{transformer_model.8} parent=0 // pred_region
    _
  $region25: #{transformer_model.8} parent=0 // pred_fallthru
    _
  // Predicated region
  $region26: #{transformer_model.8} parent=0 // pred_check
    _
  $region27: #{transformer_model.8} parent=0 // pred_check_branch
    %25 = sbr.rel (0) target = $region29
  $region28: #{transformer_model.8} parent=0 // pred_region
    _
  $region29: #{transformer_model.8} parent=0 // pred_fallthru
    _
  %v27 = vld [vmem:[%s0] sm:$0xff]
  %v28 = vld [vmem:[%s0 + $0x8] sm:$0xff]
  %v29 = vpack.c.bf16 %v28, %v27
  %v30 = vld [vmem:[%s1] sm:$0xf]
  %v31 = vld [vmem:[%s1 + $0x4] sm:$0xf]
  %v32 = vld [vmem:[%s1 + $0x8] sm:$0xf]
  %v33 = vld [vmem:[%s1 + $0xc] sm:$0xf]
  %v34 = vld [vmem:[%s1 + $0x10] sm:$0xf]
  %v35 = vld [vmem:[%s1 + $0x14] sm:$0xf]
  %v36 = vld [vmem:[%s1 + $0x18] sm:$0xf]
  %v37 = vld [vmem:[%s1 + $0x1c] sm:$0xf]
  %v38 = vld [vmem:[%s2] sm:$0x1]
  %v40 = vlaneseq
  %v41 = vshrl.u32 %v40, 7
  %v42 = vsub.s32 0, %v41
  %v43 = vrot.slane %v38, %v42
  %v53 = vunpack.c.l.b16 %v30
  %v54 = vunpack.c.l.b16 %v31
  %v55 = vunpack.c.l.b16 %v32
  %v56 = vunpack.c.l.b16 %v33
  %v57 = vunpack.c.l.b16 %v34
  %v58 = vunpack.c.l.b16 %v35
  %v59 = vunpack.c.l.b16 %v36
  %v60 = vunpack.c.l.b16 %v37
  %v61 = vpack.c.b16 %v54, %v53
  %v62 = vpack.c.b16 %v56, %v55
  %v63 = vpack.c.b16 %v58, %v57
  %v64 = vpack.c.b16 %v60, %v59
  %vm69 = vcmask 523264
  %v71 = vsel %vm69, %v29, 0
  %73 = vmatprep.subr.bf16.mxu0 0
  %74 = vmatpush1.bf16.msra.mxu0 %v61
  %75 = vmatprep.subr.bf16.mxu0 0
  %76 = vmatpush1.bf16.msra.mxu0 %v62
  %77 = vmatprep.subr.bf16.mxu0 0
  %78 = vmatpush1.bf16.msra.mxu0 %v63
  %79 = vmatprep.subr.bf16.mxu0 0
  %80 = vmatpush1.bf16.msra.mxu0 %v64
  %81 = vmatprep.subr.bf16.mxu0 0
  %82 = vmatpush1.bf16.msra.mxu0 0
  %83 = vmatprep.subr.bf16.mxu0 0
  %84 = vmatpush1.bf16.msra.mxu0 0
  %85 = vmatprep.subr.bf16.mxu0 0
  %86 = vmatpush1.bf16.msra.mxu0 0
  %87 = vmatprep.subr.bf16.mxu0 0
  %88 = vmatpush1.bf16.msra.mxu0 0
  %89 = vmatprep.subr.bf16.mxu0 0
  %90 = vmatpush1.bf16.msra.mxu0 0
  %91 = vmatprep.subr.bf16.mxu0 0
  %92 = vmatpush1.bf16.msra.mxu0 0
  %93 = vmatprep.subr.bf16.mxu0 0
  %94 = vmatpush1.bf16.msra.mxu0 0
  %95 = vmatprep.subr.bf16.mxu0 0
  %96 = vmatpush1.bf16.msra.mxu0 0
  %97 = vmatprep.subr.bf16.mxu0 0
  %98 = vmatpush1.bf16.msra.mxu0 0
  %99 = vmatprep.subr.bf16.mxu0 0
  %100 = vmatpush1.bf16.msra.mxu0 0
  %101 = vmatprep.subr.bf16.mxu0 0
  %102 = vmatpush1.bf16.msra.mxu0 0
  %103 = vmatprep.subr.bf16.mxu0 0
  %104 = vmatpush1.bf16.msra.mxu0 0
  %105 = vmatprep.mubr.bf16.mxu0 0
  %106 = vmatmul.mubr.bf16.gmra.mrb[0].mxu0 %v71
  %v107 = vpop.f32.mrb[0].mxu0
  %v108 = vadd.f32 %v43, %v107
  %v109 = vpop.f32.mrb[0].mxu0
  %v110 = vpop.f32.mrb[0].mxu0
  %v111 = vadd.f32 %v43, %v110
  %v112 = vpop.f32.mrb[0].mxu0
  %113 = vdwg.mxu0
  %v114 = vmax.f32 %v108, 0.0
  %v115 = vmax.f32 %v111, 0.0
  %v116 = vpack.c.bf16 %v115, %v114
  %v117 = vld [vmem:[%s3] sm:$0xf]
  %v118 = vld [vmem:[%s3 + $0x4] sm:$0xf]
  %v119 = vld [vmem:[%s3 + $0x8] sm:$0xf]
  %v120 = vld [vmem:[%s3 + $0xc] sm:$0xf]
  %v121 = vld [vmem:[%s3 + $0x10] sm:$0xf]
  %v122 = vld [vmem:[%s3 + $0x14] sm:$0xf]
  %v123 = vld [vmem:[%s3 + $0x18] sm:$0xf]
  %v124 = vld [vmem:[%s3 + $0x1c] sm:$0xf]
  %v125 = vld [vmem:[%s3 + $0x20] sm:$0xf]
  %v126 = vld [vmem:[%s3 + $0x24] sm:$0xf]
  %v127 = vld [vmem:[%s3 + $0x28] sm:$0xf]
  %v128 = vld [vmem:[%s3 + $0x2c] sm:$0xf]
  %v129 = vld [vmem:[%s3 + $0x30] sm:$0xf]
  %v130 = vld [vmem:[%s3 + $0x34] sm:$0xf]
  %v131 = vld [vmem:[%s3 + $0x38] sm:$0xf]
  %v132 = vld [vmem:[%s3 + $0x3c] sm:$0xf]
  %v133 = vld [vmem:[%s4] sm:$0x1]
  %v135 = vlaneseq
  %v136 = vshrl.u32 %v135, 7
  %v137 = vsub.s32 0, %v136
  %v138 = vrot.slane %v133, %v137
  %v156 = vunpack.c.l.b16 %v117
  %v157 = vunpack.c.l.b16 %v118
  %v158 = vunpack.c.l.b16 %v119
  %v159 = vunpack.c.l.b16 %v120
  %v160 = vunpack.c.l.b16 %v121
  %v161 = vunpack.c.l.b16 %v122
  %v162 = vunpack.c.l.b16 %v123
  %v163 = vunpack.c.l.b16 %v124
  %v164 = vunpack.c.l.b16 %v125
  %v165 = vunpack.c.l.b16 %v126
  %v166 = vunpack.c.l.b16 %v127
  %v167 = vunpack.c.l.b16 %v128
  %v168 = vunpack.c.l.b16 %v129
  %v169 = vunpack.c.l.b16 %v130
  %v170 = vunpack.c.l.b16 %v131
  %v171 = vunpack.c.l.b16 %v132
  %v172 = vpack.c.b16 %v157, %v156
  %v173 = vpack.c.b16 %v159, %v158
  %v174 = vpack.c.b16 %v161, %v160
  %v175 = vpack.c.b16 %v163, %v162
  %v176 = vpack.c.b16 %v165, %v164
  %v177 = vpack.c.b16 %v167, %v166
  %v178 = vpack.c.b16 %v169, %v168
  %v179 = vpack.c.b16 %v171, %v170
  %188 = vmatprep.subr.bf16.mxu0 0
  %189 = vmatpush1.bf16.msra.mxu0 %v172
  %190 = vmatprep.subr.bf16.mxu0 0
  %191 = vmatpush1.bf16.msra.mxu0 %v173
  %192 = vmatprep.subr.bf16.mxu0 0
  %193 = vmatpush1.bf16.msra.mxu0 %v174
  %194 = vmatprep.subr.bf16.mxu0 0
  %195 = vmatpush1.bf16.msra.mxu0 %v175
  %196 = vmatprep.subr.bf16.mxu0 0
  %197 = vmatpush1.bf16.msra.mxu0 %v176
  %198 = vmatprep.subr.bf16.mxu0 0
  %199 = vmatpush1.bf16.msra.mxu0 %v177
  %200 = vmatprep.subr.bf16.mxu0 0
  %201 = vmatpush1.bf16.msra.mxu0 %v178
  %202 = vmatprep.subr.bf16.mxu0 0
  %203 = vmatpush1.bf16.msra.mxu0 %v179
  %204 = vmatprep.subr.bf16.mxu0 0
  %205 = vmatpush1.bf16.msra.mxu0 0
  %206 = vmatprep.subr.bf16.mxu0 0
  %207 = vmatpush1.bf16.msra.mxu0 0
  %208 = vmatprep.subr.bf16.mxu0 0
  %209 = vmatpush1.bf16.msra.mxu0 0
  %210 = vmatprep.subr.bf16.mxu0 0
  %211 = vmatpush1.bf16.msra.mxu0 0
  %212 = vmatprep.subr.bf16.mxu0 0
  %213 = vmatpush1.bf16.msra.mxu0 0
  %214 = vmatprep.subr.bf16.mxu0 0
  %215 = vmatpush1.bf16.msra.mxu0 0
  %216 = vmatprep.subr.bf16.mxu0 0
  %217 = vmatpush1.bf16.msra.mxu0 0
  %218 = vmatprep.subr.bf16.mxu0 0
  %219 = vmatpush1.bf16.msra.mxu0 0
  %220 = vmatprep.mubr.bf16.mxu0 0
  %221 = vmatmul.mubr.bf16.gmra.mrb[0].mxu0 %v116
  %v222 = vpop.f32.mrb[0].mxu0
  %v223 = vadd.f32 %v138, %v222
  %v224 = vpop.f32.mrb[0].mxu0
  %v225 = vpop.f32.mrb[0].mxu0
  %v226 = vadd.f32 %v138, %v225
  %v227 = vpop.f32.mrb[0].mxu0
  %228 = vdwg.mxu0
  %v229 = vadd.f32 %v27, %v223
  %v230 = vadd.f32 %v28, %v226
  %v231 = vld [vmem:[%s5] sm:$0x1]
  %v232 = vld [vmem:[%s6] sm:$0x1]
  %v233 = vsel %vm69, %v229, 0.0
  %234 = vadd.xlane.f32.xlu0 %v233
  %v235 = vpop.xlane.xlu0 %234
  %v236 = vsel %vm69, %v230, 0.0
  %237 = vadd.xlane.f32.xlu0 %v236
  %v238 = vpop.xlane.xlu0 %237
  %v239 = vrcp.pop 64.0
  %v240 = vmul.f32 %v235, %v239
  %v241 = vmul.f32 %v238, %v239
  %v242 = vsub.f32 %v229, %v240
  %v243 = vsub.f32 %v230, %v241
  %v244 = vmul.f32 %v242, %v242
  %v245 = vmul.f32 %v243, %v243
  %v246 = vsel %vm69, %v244, 0.0
  %247 = vadd.xlane.f32.xlu0 %v246
  %v248 = vpop.xlane.xlu0 %247
  %v249 = vsel %vm69, %v245, 0.0
  %250 = vadd.xlane.f32.xlu0 %v249
  %v251 = vpop.xlane.xlu0 %250
  %v252 = vmul.f32 %v248, %v239
  %v253 = vmul.f32 %v251, %v239
  %v254 = vadd.f32 %v252, 1e-05
  %v255 = vadd.f32 %v253, 1e-05
  %v256 = vrsqrt.pop %v254
  %v257 = vrsqrt.pop %v255
  %v258 = vmul.f32 %v242, %v256
  %v259 = vmul.f32 %v243, %v257
  %v261 = vlaneseq
  %v262 = vshrl.u32 %v261, 7
  %v263 = vsub.s32 0, %v262
  %v264 = vrot.slane %v231, %v263
  %v266 = vmul.f32 %v258, %v264
  %v267 = vmul.f32 %v259, %v264
  %v269 = vlaneseq
  %v270 = vshrl.u32 %v269, 7
  %v271 = vsub.s32 0, %v270
  %v272 = vrot.slane %v232, %v271
  %v274 = vadd.f32 %v266, %v272
  %v275 = vadd.f32 %v267, %v272
  %276 = vst.msk [vmem:[%s7] sm:$0xff] %vm69, %v274
  %277 = vst.msk [vmem:[%s7 + $0x8] sm:$0xff] %vm69, %v275
  // Predicated region
  $region30: #{transformer_model.8} parent=0 // pred_check
    _
  $region31: #{transformer_model.8} parent=0 // pred_check_branch
    %279 = sbr.rel (0) target = $region33
  $region32: #{transformer_model.8} parent=0 // pred_region
    _
  $region33: #{transformer_model.8} parent=0 // pred_fallthru
    _
  // Predicated region
  $region34: #{transformer_model.8} parent=0 // pred_check
    _
  $region35: #{transformer_model.8} parent=0 // pred_check_branch
    %281 = sbr.rel (0) target = $region37
  $region36: #{transformer_model.8} parent=0 // pred_region
    _
  $region37: #{transformer_model.8} parent=0 // pred_fallthru
    _

// kernel: transformer_model.11
$region0: #{transformer_model.11}
  #allocation0 [shape = 'u32[]', space=smem, size = 0x4, offset = 0x4, fixed_abs, tag = 'smem constant byte address 0x4 - core index']
  #allocation1 [shape = 'u32[144,128]{1,0:T(1,128)}', space=vmem, size = 0x12000, scoped, tag = 'internal scratch']
  #allocation2 [shape = 'f32[16,64]{1,0:T(8,128)}', space=vmem, size = 0x2000, scoped, tag = 'scratch operand']
  %s0 = inlined_call_operand.vmem [shape: f32[16,64], index: 0, kind: input, shape index: {}]
  %s1 = inlined_call_operand.vmem [shape: bf16[64,64], index: 1, kind: input, shape index: {}]
  %s2 = inlined_call_operand.vmem [shape: f32[1,64], index: 2, kind: input, shape index: {}]
  %s3 = inlined_call_operand.hbm [shape: f32[16,64], index: 3, kind: output, shape index: {}]
  %s4 = sld [smem:[#allocation0]]
  $region30: #{transformer_model.11} parent=0
    _
  %s6 = ssub.s32 1, %s4
  %s7 = scalar_select 0, %s6, %s4
  $region1: #{transformer_model.11} parent=0
    #allocation3 [shape = 'u8[8192]{0}', space=vmem, size = 0x2000, scoped, tag = 'output window, operand 0, single buffered']
    #allocation4 [shape = 's32[1]{0}', space=sflag, size = 0x4, scoped, tag = 'scoped memory for transformer_model.11']
    %8 = vsyncpa [#allocation4], 0
    // Predicated region
    $region2: #{transformer_model.11} parent=1 // pred_check
      _
    $region3: #{transformer_model.11} parent=1 // pred_check_branch
      %10 = sbr.rel (0) target = $region5
    $region4: #{transformer_model.11} parent=1 // pred_region
      _
    $region5: #{transformer_model.11} parent=1 // pred_fallthru
      _
    // Predicated region
    $region6: #{transformer_model.11} parent=1 // pred_check
      _
    $region7: #{transformer_model.11} parent=1 // pred_check_branch
      %12 = sbr.rel (0) target = $region9
    $region8: #{transformer_model.11} parent=1 // pred_region
      _
    $region9: #{transformer_model.11} parent=1 // pred_fallthru
      _
    // Predicated region
    $region10: #{transformer_model.11} parent=1 // pred_check
      _
    $region11: #{transformer_model.11} parent=1 // pred_check_branch
      %14 = sbr.rel (0) target = $region13
    $region12: #{transformer_model.11} parent=1 // pred_region
      _
    $region13: #{transformer_model.11} parent=1 // pred_fallthru
      _
    %p16 = scmp.eq.s32.totalorder 0, 0
    // Predicated region
    $region14: #{transformer_model.11} parent=1 // pred_check
      %p17 = pneg %p16
    $region15: #{transformer_model.11} parent=1 // pred_check_branch
      %19 = sbr.rel (%p17) target = $region17
    $region16: #{transformer_model.11} parent=1 // pred_region
      %vm20 = vcmask 523264
      %21 = vst.msk [vmem:[#allocation2] sm:$0xff] %vm20, 0.0
      %22 = vst.msk [vmem:[#allocation2 + $0x8] sm:$0xff] %vm20, 0.0
    $region17: #{transformer_model.11} parent=1 // pred_fallthru
      _
    %v23 = vld [vmem:[#allocation2] sm:$0xff]
    %v24 = vld [vmem:[#allocation2 + $0x8] sm:$0xff]
    %v25 = vld [vmem:[%s0] sm:$0xff]
    %v26 = vld [vmem:[%s0 + $0x8] sm:$0xff]
    %v27 = vpack.c.bf16 %v26, %v25
    %v28 = vld [vmem:[%s1] sm:$0xf]
    %v29 = vld [vmem:[%s1 + $0x4] sm:$0xf]
    %v30 = vld [vmem:[%s1 + $0x8] sm:$0xf]
    %v31 = vld [vmem:[%s1 + $0xc] sm:$0xf]
    %v32 = vld [vmem:[%s1 + $0x10] sm:$0xf]
    %v33 = vld [vmem:[%s1 + $0x14] sm:$0xf]
    %v34 = vld [vmem:[%s1 + $0x18] sm:$0xf]
    %v35 = vld [vmem:[%s1 + $0x1c] sm:$0xf]
    %v44 = vunpack.c.l.b16 %v28
    %v45 = vunpack.c.l.b16 %v29
    %v46 = vunpack.c.l.b16 %v30
    %v47 = vunpack.c.l.b16 %v31
    %v48 = vunpack.c.l.b16 %v32
    %v49 = vunpack.c.l.b16 %v33
    %v50 = vunpack.c.l.b16 %v34
    %v51 = vunpack.c.l.b16 %v35
    %v52 = vpack.c.b16 %v45, %v44
    %v53 = vpack.c.b16 %v47, %v46
    %v54 = vpack.c.b16 %v49, %v48
    %v55 = vpack.c.b16 %v51, %v50
    %vm60 = vcmask 523264
    %v62 = vsel %vm60, %v27, 0
    %64 = vmatprep.subr.bf16.mxu0 0
    %65 = vmatpush1.bf16.msra.mxu0 %v52
    %66 = vmatprep.subr.bf16.mxu0 0
    %67 = vmatpush1.bf16.msra.mxu0 %v53
    %68 = vmatprep.subr.bf16.mxu0 0
    %69 = vmatpush1.bf16.msra.mxu0 %v54
    %70 = vmatprep.subr.bf16.mxu0 0
    %71 = vmatpush1.bf16.msra.mxu0 %v55
    %72 = vmatprep.subr.bf16.mxu0 0
    %73 = vmatpush1.bf16.msra.mxu0 0
    %74 = vmatprep.subr.bf16.mxu0 0
    %75 = vmatpush1.bf16.msra.mxu0 0
    %76 = vmatprep.subr.bf16.mxu0 0
    %77 = vmatpush1.bf16.msra.mxu0 0
    %78 = vmatprep.subr.bf16.mxu0 0
    %79 = vmatpush1.bf16.msra.mxu0 0
    %80 = vmatprep.subr.bf16.mxu0 0
    %81 = vmatpush1.bf16.msra.mxu0 0
    %82 = vmatprep.subr.bf16.mxu0 0
    %83 = vmatpush1.bf16.msra.mxu0 0
    %84 = vmatprep.subr.bf16.mxu0 0
    %85 = vmatpush1.bf16.msra.mxu0 0
    %86 = vmatprep.subr.bf16.mxu0 0
    %87 = vmatpush1.bf16.msra.mxu0 0
    %88 = vmatprep.subr.bf16.mxu0 0
    %89 = vmatpush1.bf16.msra.mxu0 0
    %90 = vmatprep.subr.bf16.mxu0 0
    %91 = vmatpush1.bf16.msra.mxu0 0
    %92 = vmatprep.subr.bf16.mxu0 0
    %93 = vmatpush1.bf16.msra.mxu0 0
    %94 = vmatprep.subr.bf16.mxu0 0
    %95 = vmatpush1.bf16.msra.mxu0 0
    %96 = vmatprep.mubr.bf16.mxu0 0
    %97 = vmatmul.mubr.bf16.gmra.mrb[0].mxu0 %v62
    %v98 = vpop.f32.mrb[0].mxu0
    %v99 = vadd.f32 0.0, %v98
    %v100 = vpop.f32.mrb[0].mxu0
    %v101 = vpop.f32.mrb[0].mxu0
    %v102 = vadd.f32 0.0, %v101
    %v103 = vpop.f32.mrb[0].mxu0
    %104 = vdwg.mxu0
    %v105 = vadd.f32 %v23, %v99
    %v106 = vadd.f32 %v24, %v102
    %107 = vst.msk [vmem:[#allocation2] sm:$0xff] %vm60, %v105
    %108 = vst.msk [vmem:[#allocation2 + $0x8] sm:$0xff] %vm60, %v106
    // Predicated region
    $region18: #{transformer_model.11} parent=1 // pred_check
      %p109 = pneg %p16
    $region19: #{transformer_model.11} parent=1 // pred_check_branch
      %111 = sbr.rel (%p109) target = $region21
    $region20: #{transformer_model.11} parent=1 // pred_region
      %v112 = vld [vmem:[#allocation2] sm:$0xff]
      %v113 = vld [vmem:[#allocation2 + $0x8] sm:$0xff]
      %v114 = vld [vmem:[%s2] sm:$0x1]
      %v116 = vlaneseq
      %v117 = vshrl.u32 %v116, 7
      %v118 = vsub.s32 0, %v117
      %v119 = vrot.slane %v114, %v118
      %v121 = vadd.f32 %v112, %v119
      %v122 = vadd.f32 %v113, %v119
      %123 = vst.msk [vmem:[#allocation3] sm:$0xff] %vm60, %v121
      %124 = vst.msk [vmem:[#allocation3 + $0x8] sm:$0xff] %vm60, %v122
    $region21: #{transformer_model.11} parent=1 // pred_fallthru
      _
    // Predicated region
    $region22: #{transformer_model.11} parent=1 // pred_check
      _
    $region23: #{transformer_model.11} parent=1 // pred_check_branch
      %126 = sbr.rel (0) target = $region25
    $region24: #{transformer_model.11} parent=1 // pred_region
      %s128 = ssub.s32 256, 256
      %129 = vsyncadd [#allocation4], %s128
      %s130 = sshll.u32 [#allocation3], 4
      %s131 = int_to_ptr.vmem [resolvable:$true] %s130
      %136 = dma.vmem_to_hbm [thread:$0]  %s131, 256, %s3, [#allocation4], 128, 128, 8
    $region25: #{transformer_model.11} parent=1 // pred_fallthru
      _
    // Predicated region
    $region26: #{transformer_model.11} parent=1 // pred_check
      _
    $region27: #{transformer_model.11} parent=1 // pred_check_branch
      %138 = sbr.rel (0) target = $region29
    $region28: #{transformer_model.11} parent=1 // pred_region
      %139 = dma.done [#allocation4], 256
    $region29: #{transformer_model.11} parent=1 // pred_fallthru
      _
    %140 = vsyncpa [#allocation4], 1

// kernel: transformer_model.7
$region0: #{transformer_model.7}
  #allocation0 [shape = 'u32[]', space=smem, size = 0x4, offset = 0x4, fixed_abs, tag = 'smem constant byte address 0x4 - core index']
  #allocation1 [shape = 'u32[144,128]{1,0:T(1,128)}', space=vmem, size = 0x12000, scoped, tag = 'internal scratch']
  %s0 = inlined_call_operand.vmem [shape: f32[2,8,64], index: 0, kind: input, shape index: {}]
  %s1 = inlined_call_operand.vmem [shape: bf16[64,192], index: 1, kind: input, shape index: {}]
  %s2 = inlined_call_operand.vmem [shape: f32[1,192], index: 2, kind: input, shape index: {}]
  %s3 = inlined_call_operand.vmem [shape: bf16[64,64], index: 3, kind: input, shape index: {}]
  %s4 = inlined_call_operand.vmem [shape: f32[1,64], index: 4, kind: input, shape index: {}]
  %s5 = inlined_call_operand.vmem [shape: f32[1,64], index: 5, kind: input, shape index: {}]
  %s6 = inlined_call_operand.vmem [shape: f32[1,64], index: 6, kind: input, shape index: {}]
  %s7 = inlined_call_operand.vmem [shape: f32[2,8,64], index: 7, kind: output, shape index: {}]
  %s8 = sld [smem:[#allocation0]]
  $region61: #{transformer_model.7} parent=0
    _
  %s10 = ssub.s32 1, %s8
  %s11 = scalar_select 0, %s10, %s8
  loop: start=0, step=1, limit=4
  $region2: #{transformer_model.7} parent=0 // loop_pre_header
    _
  $region3: #{transformer_model.7} parent=0 // loop_header
    %s13 = sphi 0, %s17
    %p14 = scmp.ge.s32.totalorder %s13, 4
    %s23 = sphi 0, %s25
    %s26 = sphi 0, %s23
    %s27 = sphi 0, %s26
    %s43 = sphi 0, %s27
    %s47 = sphi 0, %s47
    %s49 = sphi 0, %s47
    %s50 = sphi 0, %s49
    %s64 = sphi 0, %s50
    %s68 = sphi 0, %s68
    %s70 = sphi 0, %s68
    %s71 = sphi 0, %s70
    %s85 = sphi 0, %s71
    %s89 = sphi 0, %s89
    %s91 = sphi 0, %s89
    %s92 = sphi 0, %s91
    %s106 = sphi 0, %s92
    %s110 = sphi 0, %s110
    %s112 = sphi 0, %s110
    %s113 = sphi 0, %s112
    %s127 = sphi 0, %s113
    %s131 = sphi 0, %s131
    %s133 = sphi 0, %s131
    %s134 = sphi 0, %s133
    %s148 = sphi 0, %s134
    %s152 = sphi 0, %s152
    %s154 = sphi 0, %s152
    %s155 = sphi 0, %s154
    %s169 = sphi 0, %s155
    %s175 = sphi 0, %s177
    %s178 = sphi 0, %s175
    %s179 = sphi 0, %s178
    %s195 = sphi 0, %s179
  $region4: #{transformer_model.7} parent=0 // loop_header_branch
    %16 = sbr.rel (%p14) target = $region8
  $region5: #{transformer_model.7} parent=0 // loop_body
    %s18 = ssub.s32 %s13, 1
    %s19 = ssub.s32 %s13, 2
    %s20 = sadd.s32 %s13, 1
    %s21 = ssub.s32 %s13, %s20
    %p22 = scmp.eq.s32.totalorder %s21, 0
    %s24 = sadd.s32 %s23, 1
    %s25 = scalar_select %p22, %s23, %s24
    %p28 = pneg %p22
    %p29 = scmp.eq.s32.totalorder %s13, 1
    %p30 = por %p28, %p29
    %p31 = scmp.ne.s32.totalorder %s23, %s26
    %p32 = scmp.eq.s32.totalorder %s13, 0
    %p33 = por %p31, %p32
    %p34 = scmp.ne.s32.totalorder %s23, %s26
    %p35 = scmp.eq.s32.totalorder %s18, 1
    %p36 = por %p34, %p35
    %p37 = scmp.ne.s32.totalorder %s26, %s27
    %p38 = scmp.eq.s32.totalorder %s18, 0
    %p39 = por %p37, %p38
    %p40 = scmp.ne.s32.totalorder %s26, %s27
    %p41 = scmp.eq.s32.totalorder %s19, 1
    %p42 = por %p40, %p41
    %p44 = scmp.ne.s32.totalorder %s27, %s43
    %p45 = scmp.eq.s32.totalorder %s19, 0
    %p46 = por %p44, %p45
    %s48 = sadd.s32 %s47, 1
    %p51 = scmp.eq.s32.totalorder %s13, 1
    %p52 = scmp.ne.s32.totalorder %s47, %s49
    %p53 = scmp.eq.s32.totalorder %s13, 0
    %p54 = por %p52, %p53
    %p55 = scmp.ne.s32.totalorder %s47, %s49
    %p56 = scmp.eq.s32.totalorder %s18, 1
    %p57 = por %p55, %p56
    %p58 = scmp.ne.s32.totalorder %s49, %s50
    %p59 = scmp.eq.s32.totalorder %s18, 0
    %p60 = por %p58, %p59
    %p61 = scmp.ne.s32.totalorder %s49, %s50
    %p62 = scmp.eq.s32.totalorder %s19, 1
    %p63 = por %p61, %p62
    %p65 = scmp.ne.s32.totalorder %s50, %s64
    %p66 = scmp.eq.s32.totalorder %s19, 0
    %p67 = por %p65, %p66
    %s69 = sadd.s32 %s68, 1
    %p72 = scmp.eq.s32.totalorder %s13, 1
    %p73 = scmp.ne.s32.totalorder %s68, %s70
    %p74 = scmp.eq.s32.totalorder %s13, 0
    %p75 = por %p73, %p74
    %p76 = scmp.ne.s32.totalorder %s68, %s70
    %p77 = scmp.eq.s32.totalorder %s18, 1
    %p78 = por %p76, %p77
    %p79 = scmp.ne.s32.totalorder %s70, %s71
    %p80 = scmp.eq.s32.totalorder %s18, 0
    %p81 = por %p79, %p80
    %p82 = scmp.ne.s32.totalorder %s70, %s71
    %p83 = scmp.eq.s32.totalorder %s19, 1
    %p84 = por %p82, %p83
    %p86 = scmp.ne.s32.totalorder %s71, %s85
    %p87 = scmp.eq.s32.totalorder %s19, 0
    %p88 = por %p86, %p87
    %s90 = sadd.s32 %s89, 1
    %p93 = scmp.eq.s32.totalorder %s13, 1
    %p94 = scmp.ne.s32.totalorder %s89, %s91
    %p95 = scmp.eq.s32.totalorder %s13, 0
    %p96 = por %p94, %p95
    %p97 = scmp.ne.s32.totalorder %s89, %s91
    %p98 = scmp.eq.s32.totalorder %s18, 1
    %p99 = por %p97, %p98
    %p100 = scmp.ne.s32.totalorder %s91, %s92
    %p101 = scmp.eq.s32.totalorder %s18, 0
    %p102 = por %p100, %p101
    %p103 = scmp.ne.s32.totalorder %s91, %s92
    %p104 = scmp.eq.s32.totalorder %s19, 1
    %p105 = por %p103, %p104
    %p107 = scmp.ne.s32.totalorder %s92, %s106
    %p108 = scmp.eq.s32.totalorder %s19, 0
    %p109 = por %p107, %p108
    %s111 = sadd.s32 %s110, 1
    %p114 = scmp.eq.s32.totalorder %s13, 1
    %p115 = scmp.ne.s32.totalorder %s110, %s112
    %p116 = scmp.eq.s32.totalorder %s13, 0
    %p117 = por %p115, %p116
    %p118 = scmp.ne.s32.totalorder %s110, %s112
    %p119 = scmp.eq.s32.totalorder %s18, 1
    %p120 = por %p118, %p119
    %p121 = scmp.ne.s32.totalorder %s112, %s113
    %p122 = scmp.eq.s32.totalorder %s18, 0
    %p123 = por %p121, %p122
    %p124 = scmp.ne.s32.totalorder %s112, %s113
    %p125 = scmp.eq.s32.totalorder %s19, 1
    %p126 = por %p124, %p125
    %p128 = scmp.ne.s32.totalorder %s113, %s127
    %p129 = scmp.eq.s32.totalorder %s19, 0
    %p130 = por %p128, %p129
    %s132 = sadd.s32 %s131, 1
    %p135 = scmp.eq.s32.totalorder %s13, 1
    %p136 = scmp.ne.s32.totalorder %s131, %s133
    %p137 = scmp.eq.s32.totalorder %s13, 0
    %p138 = por %p136, %p137
    %p139 = scmp.ne.s32.totalorder %s131, %s133
    %p140 = scmp.eq.s32.totalorder %s18, 1
    %p141 = por %p139, %p140
    %p142 = scmp.ne.s32.totalorder %s133, %s134
    %p143 = scmp.eq.s32.totalorder %s18, 0
    %p144 = por %p142, %p143
    %p145 = scmp.ne.s32.totalorder %s133, %s134
    %p146 = scmp.eq.s32.totalorder %s19, 1
    %p147 = por %p145, %p146
    %p149 = scmp.ne.s32.totalorder %s134, %s148
    %p150 = scmp.eq.s32.totalorder %s19, 0
    %p151 = por %p149, %p150
    %s153 = sadd.s32 %s152, 1
    %p156 = scmp.eq.s32.totalorder %s13, 1
    %p157 = scmp.ne.s32.totalorder %s152, %s154
    %p158 = scmp.eq.s32.totalorder %s13, 0
    %p159 = por %p157, %p158
    %p160 = scmp.ne.s32.totalorder %s152, %s154
    %p161 = scmp.eq.s32.totalorder %s18, 1
    %p162 = por %p160, %p161
    %p163 = scmp.ne.s32.totalorder %s154, %s155
    %p164 = scmp.eq.s32.totalorder %s18, 0
    %p165 = por %p163, %p164
    %p166 = scmp.ne.s32.totalorder %s154, %s155
    %p167 = scmp.eq.s32.totalorder %s19, 1
    %p168 = por %p166, %p167
    %p170 = scmp.ne.s32.totalorder %s155, %s169
    %p171 = scmp.eq.s32.totalorder %s19, 0
    %p172 = por %p170, %p171
    %s173 = ssub.s32 %s13, %s20
    %p174 = scmp.eq.s32.totalorder %s173, 0
    %s176 = sadd.s32 %s175, 1
    %s177 = scalar_select %p174, %s175, %s176
    %p180 = pneg %p174
    %p181 = scmp.eq.s32.totalorder %s13, 1
    %p182 = por %p180, %p181
    %p183 = scmp.ne.s32.totalorder %s175, %s178
    %p184 = scmp.eq.s32.totalorder %s13, 0
    %p185 = por %p183, %p184
    %p186 = scmp.ne.s32.totalorder %s175, %s178
    %p187 = scmp.eq.s32.totalorder %s18, 1
    %p188 = por %p186, %p187
    %p189 = scmp.ne.s32.totalorder %s178, %s179
    %p190 = scmp.eq.s32.totalorder %s18, 0
    %p191 = por %p189, %p190
    %p192 = scmp.ne.s32.totalorder %s178, %s179
    %p193 = scmp.eq.s32.totalorder %s19, 1
    %p194 = por %p192, %p193
    %p196 = scmp.ne.s32.totalorder %s179, %s195
    %p197 = scmp.eq.s32.totalorder %s19, 0
    %p198 = por %p196, %p197
    %p199 = scmp.le.s32.totalorder 1, %s13
    %p200 = scmp.lt.s32.totalorder %s13, 3
    %p201 = pnand %p199, %p200
    %p202 = pneg %p201
    // Predicated region
    $region9: #{transformer_model.7} parent=5 // pred_check
      _
    $region10: #{transformer_model.7} parent=5 // pred_check_branch
      %204 = sbr.rel (%p201) target = $region12
    $region11: #{transformer_model.7} parent=5 // pred_region
      %s205 = ssub.s32 %s13, 1
      // Predicated region
      $region13: #{transformer_model.7} parent=11 // pred_check
        %p206 = pneg %p60
      $region14: #{transformer_model.7} parent=11 // pred_check_branch
        %208 = sbr.rel (%p206) target = $region16
      $region15: #{transformer_model.7} parent=11 // pred_region
        _
      $region16: #{transformer_model.7} parent=11 // pred_fallthru
        _
      // Predicated region
      $region17: #{transformer_model.7} parent=11 // pred_check
        %p209 = pneg %p81
      $region18: #{transformer_model.7} parent=11 // pred_check_branch
        %211 = sbr.rel (%p209) target = $region20
      $region19: #{transformer_model.7} parent=11 // pred_region
        _
      $region20: #{transformer_model.7} parent=11 // pred_fallthru
        _
      // Predicated region
      $region21: #{transformer_model.7} parent=11 // pred_check
        %p212 = pneg %p102
      $region22: #{transformer_model.7} parent=11 // pred_check_branch
        %214 = sbr.rel (%p212) target = $region24
      $region23: #{transformer_model.7} parent=11 // pred_region
        _
      $region24: #{transformer_model.7} parent=11 // pred_fallthru
        _
      // Predicated region
      $region25: #{transformer_model.7} parent=11 // pred_check
        %p215 = pneg %p123
      $region26: #{transformer_model.7} parent=11 // pred_check_branch
        %217 = sbr.rel (%p215) target = $region28
      $region27: #{transformer_model.7} parent=11 // pred_region
        _
      $region28: #{transformer_model.7} parent=11 // pred_fallthru
        _
      // Predicated region
      $region29: #{transformer_model.7} parent=11 // pred_check
        %p218 = pneg %p144
      $region30: #{transformer_model.7} parent=11 // pred_check_branch
        %220 = sbr.rel (%p218) target = $region32
      $region31: #{transformer_model.7} parent=11 // pred_region
        _
      $region32: #{transformer_model.7} parent=11 // pred_fallthru
        _
      // Predicated region
      $region33: #{transformer_model.7} parent=11 // pred_check
        %p221 = pneg %p165
      $region34: #{transformer_model.7} parent=11 // pred_check_branch
        %223 = sbr.rel (%p221) target = $region36
      $region35: #{transformer_model.7} parent=11 // pred_region
        _
      $region36: #{transformer_model.7} parent=11 // pred_fallthru
        _
    $region12: #{transformer_model.7} parent=5 // pred_fallthru
      _
    %p224 = scmp.lt.s32.totalorder %s13, 2
    // Predicated region
    $region37: #{transformer_model.7} parent=5 // pred_check
      %p225 = pneg %p224
    $region38: #{transformer_model.7} parent=5 // pred_check_branch
      %227 = sbr.rel (%p225) target = $region40
    $region39: #{transformer_model.7} parent=5 // pred_region
      // Predicated region
      $region41: #{transformer_model.7} parent=39 // pred_check
        %p228 = pneg %p33
      $region42: #{transformer_model.7} parent=39 // pred_check_branch
        %230 = sbr.rel (%p228) target = $region44
      $region43: #{transformer_model.7} parent=39 // pred_region
        %p231 = scmp.lt.s32.totalorder %s13, 1
        %s232 = scalar_select %p231, %s13, 1
        %s233 = smul.addr %s232, 8
        %s234 = scalar_lea.vmem %s0, %s233
      $region44: #{transformer_model.7} parent=39 // pred_fallthru
        _
    $region40: #{transformer_model.7} parent=5 // pred_fallthru
      _
    %p235 = scmp.le.s32.totalorder 1, %s13
    %p236 = scmp.lt.s32.totalorder %s13, 3
    %p237 = pnand %p235, %p236
    %p238 = pneg %p237
    // Predicated region
    $region45: #{transformer_model.7} parent=5 // pred_check
      _
    $region46: #{transformer_model.7} parent=5 // pred_check_branch
      %240 = sbr.rel (%p237) target = $region48
    $region47: #{transformer_model.7} parent=5 // pred_region
      %s241 = ssub.s32 %s13, 1
      %p242 = scmp.lt.s32.totalorder %s18, 1
      %s243 = scalar_select %p242, %s18, 1
      %s244 = smul.addr %s243, 8
      %s245 = scalar_lea.vmem %s0, %s244
      %p246 = pneg %p39
      %p247 = pneg %p36
      %p248 = pneg %p60
      %p249 = pneg %p57
      %p250 = pneg %p81
      %p251 = pneg %p78
      %p252 = pneg %p102
      %p253 = pneg %p99
      %p254 = pneg %p123
      %p255 = pneg %p120
      %p256 = pneg %p144
      %p257 = pneg %p141
      %p258 = pneg %p165
      %p259 = pneg %p162
      %p260 = pneg %p191
      %p261 = pneg %p188
      %p262 = scmp.lt.s32.totalorder %s18, 1
      %s263 = scalar_select %p262, %s18, 1
      %s264 = smul.addr %s263, 8
      %s265 = scalar_lea.vmem %s7, %s264
      %p266 = scmp.lt.s32.totalorder %s18, 1
      %s267 = scalar_select %p266, %s18, 1
      %s268 = smul.addr %s267, 8
      %s269 = scalar_lea.vmem %s0, %s268
      %p270 = scmp.lt.s32.totalorder %s18, 1
      %s271 = scalar_select %p270, %s18, 1
      %s272 = smul.addr %s271, 8
      %s273 = scalar_lea.vmem %s7, %s272
      %v275 = vld [vmem:[%s269] sm:$0xff]
      %v276 = vpack.c.bf16 %v275, %v275
      %v277 = vld [vmem:[%s1] sm:$0xff]
      %v278 = vld [vmem:[%s1 + $0x8] sm:$0xff]
      %v279 = vld [vmem:[%s1 + $0x10] sm:$0xff]
      %v280 = vld [vmem:[%s1 + $0x18] sm:$0xff]
      %v281 = vld [vmem:[%s1 + $0x20] sm:$0xff]
      %v282 = vld [vmem:[%s1 + $0x28] sm:$0xff]
      %v283 = vld [vmem:[%s1 + $0x30] sm:$0xff]
      %v284 = vld [vmem:[%s1 + $0x38] sm:$0xff]
      %v285 = vld [vmem:[%s2] sm:$0x3]
      %v287 = vlaneseq
      %v288 = vshrl.u32 %v287, 7
      %v289 = vsub.s32 0, %v288
      %v290 = vrot.slane %v285, %v289
      %v291 = vlaneseq
      %v292 = vshrl.u32 %v291, 7
      %v293 = vsub.s32 1, %v292
      %v294 = vrot.slane %v285, %v293
      %v305 = vunpack.c.l.b16 %v277
      %v306 = vunpack.c.h.b16 %v277
      %v307 = vunpack.c.l.b16 %v278
      %v308 = vunpack.c.h.b16 %v278
      %v309 = vunpack.c.l.b16 %v279
      %v310 = vunpack.c.h.b16 %v279
      %v311 = vunpack.c.l.b16 %v280
      %v312 = vunpack.c.h.b16 %v280
      %v313 = vunpack.c.l.b16 %v281
      %v314 = vunpack.c.h.b16 %v281
      %v315 = vunpack.c.l.b16 %v282
      %v316 = vunpack.c.h.b16 %v282
      %v317 = vunpack.c.l.b16 %v283
      %v318 = vunpack.c.h.b16 %v283
      %v319 = vunpack.c.l.b16 %v284
      %v320 = vunpack.c.h.b16 %v284
      %v321 = vpack.c.b16 %v307, %v305
      %v322 = vpack.c.b16 %v308, %v306
      %v323 = vpack.c.b16 %v311, %v309
      %v324 = vpack.c.b16 %v312, %v310
      %v325 = vpack.c.b16 %v315, %v313
      %v326 = vpack.c.b16 %v316, %v314
      %v327 = vpack.c.b16 %v319, %v317
      %v328 = vpack.c.b16 %v320, %v318
      %vm337 = vcmask 523264
      %v339 = vsel %vm337, %v276, 0
      %341 = vmatprep.subr.bf16.mxu0 %v322
      %342 = vmatpush1.bf16.msra.mxu0 %v321
      %343 = vmatprep.subr.bf16.mxu0 %v324
      %344 = vmatpush1.bf16.msra.mxu0 %v323
      %345 = vmatprep.subr.bf16.mxu0 %v326
      %346 = vmatpush1.bf16.msra.mxu0 %v325
      %347 = vmatprep.subr.bf16.mxu0 %v328
      %348 = vmatpush1.bf16.msra.mxu0 %v327
      %349 = vmatprep.subr.bf16.mxu0 0
      %350 = vmatpush1.bf16.msra.mxu0 0
      %351 = vmatprep.subr.bf16.mxu0 0
      %352 = vmatpush1.bf16.msra.mxu0 0
      %353 = vmatprep.subr.bf16.mxu0 0
      %354 = vmatpush1.bf16.msra.mxu0 0
      %355 = vmatprep.subr.bf16.mxu0 0
      %356 = vmatpush1.bf16.msra.mxu0 0
      %357 = vmatprep.subr.bf16.mxu0 0
      %358 = vmatpush1.bf16.msra.mxu0 0
      %359 = vmatprep.subr.bf16.mxu0 0
      %360 = vmatpush1.bf16.msra.mxu0 0
      %361 = vmatprep.subr.bf16.mxu0 0
      %362 = vmatpush1.bf16.msra.mxu0 0
      %363 = vmatprep.subr.bf16.mxu0 0
      %364 = vmatpush1.bf16.msra.mxu0 0
      %365 = vmatprep.subr.bf16.mxu0 0
      %366 = vmatpush1.bf16.msra.mxu0 0
      %367 = vmatprep.subr.bf16.mxu0 0
      %368 = vmatpush1.bf16.msra.mxu0 0
      %369 = vmatprep.subr.bf16.mxu0 0
      %370 = vmatpush1.bf16.msra.mxu0 0
      %371 = vmatprep.subr.bf16.mxu0 0
      %372 = vmatpush1.bf16.msra.mxu0 0
      %373 = vmatprep.mubr.bf16.mxu0 0
      %374 = vmatmul.mubr.bf16.gmra.mrb[0].mxu0 %v339
      %v375 = vpop.f32.mrb[0].mxu0
      %v376 = vadd.f32 %v290, %v375
      %v377 = vpop.f32.mrb[0].mxu0
      %v378 = vadd.f32 %v294, %v377
      %v379 = vpop.f32.mrb[0].mxu0
      %v380 = vpop.f32.mrb[0].mxu0
      %381 = vdwg.mxu0
      %v382 = vmul.f32 %v376, 0.25
      %v383 = vpack.c.bf16 %v382, %v382
      %v384 = vpack.c.bf16 %v376, %v376
      %v385 = vpack.c.bf16 %v378, %v378
      %387 = vrot.lane.b32.xlu0 %v384, 64
      %v388 = vpop.permute.xlu0 %387
      %vm389 = vcmask 130048
      %v391 = vsel %vm389, %v383, 0
      %v394 = vsel %vm389, %v388, 0
      %396 = vmatprep.subr.bf16.mxu0 0
      %397 = vmatpush1.bf16.xpose.msra.mxu0 %v394
      %398 = vmatprep.subr.bf16.mxu0 0
      %399 = vmatpush1.bf16.xpose.msra.mxu0 0
      %400 = vmatprep.subr.bf16.mxu0 0
      %401 = vmatpush1.bf16.xpose.msra.mxu0 0
      %402 = vmatprep.subr.bf16.mxu0 0
      %403 = vmatpush1.bf16.xpose.msra.mxu0 0
      %404 = vmatprep.subr.bf16.mxu0 0
      %405 = vmatpush1.bf16.xpose.msra.mxu0 0
      %406 = vmatprep.subr.bf16.mxu0 0
      %407 = vmatpush1.bf16.xpose.msra.mxu0 0
      %408 = vmatprep.subr.bf16.mxu0 0
      %409 = vmatpush1.bf16.xpose.msra.mxu0 0
      %410 = vmatprep.subr.bf16.mxu0 0
      %411 = vmatpush1.bf16.xpose.msra.mxu0 0
      %412 = vmatprep.subr.bf16.mxu0 0
      %413 = vmatpush1.bf16.xpose.msra.mxu0 0
      %414 = vmatprep.subr.bf16.mxu0 0
      %415 = vmatpush1.bf16.xpose.msra.mxu0 0
      %416 = vmatprep.subr.bf16.mxu0 0
      %417 = vmatpush1.bf16.xpose.msra.mxu0 0
      %418 = vmatprep.subr.bf16.mxu0 0
      %419 = vmatpush1.bf16.xpose.msra.mxu0 0
      %420 = vmatprep.subr.bf16.mxu0 0
      %421 = vmatpush1.bf16.xpose.msra.mxu0 0
      %422 = vmatprep.subr.bf16.mxu0 0
      %423 = vmatpush1.bf16.xpose.msra.mxu0 0
      %424 = vmatprep.subr.bf16.mxu0 0
      %425 = vmatpush1.bf16.xpose.msra.mxu0 0
      %426 = vmatprep.subr.bf16.mxu0 0
      %427 = vmatpush1.bf16.xpose.msra.mxu0 0
      %428 = vmatprep.mubr.bf16.mxu0 0
      %429 = vmatmul.mubr.bf16.gmra.mrb[0].mxu0 %v391
      %v430 = vpop.f32.mrb[0].mxu0
      %v431 = vadd.f32 0.0, %v430
      %v432 = vpop.f32.mrb[0].mxu0
      %v433 = vpop.f32.mrb[0].mxu0
      %v434 = vpop.f32.mrb[0].mxu0
      %435 = vdwg.mxu0
      %vm436 = vcmask 64512
      %v437 = vsel %vm436, %v431, -inf
      %438 = vmax.xlane.f32.xlu0 %v437
      %v439 = vpop.xlane.xlu0 %438
      %v440 = vsub.f32 %v431, %v439
      %v441 = vmul.f32 %v440, 1.442695
      %v442 = vpow.pop %v441
      %v443 = vsel %vm436, %v442, 0.0
      %444 = vadd.xlane.f32.xlu0 %v443
      %v445 = vpop.xlane.xlu0 %444
      %v446 = vrcp.pop %v445
      %v447 = vmul.f32 %v442, %v446
      %v448 = vpack.c.bf16 %v447, %v447
      %v450 = vsel %vm436, %v448, 0
      %vm452 = vcmask 1043456
      %v454 = vsel %vm452, %v385, 0
      %456 = vmatprep.subr.bf16.mxu0 0
      %457 = vmatpush1.bf16.msra.mxu0 %v454
      %458 = vmatprep.subr.bf16.mxu0 0
      %459 = vmatpush1.bf16.msra.mxu0 0
      %460 = vmatprep.subr.bf16.mxu0 0
      %461 = vmatpush1.bf16.msra.mxu0 0
      %462 = vmatprep.subr.bf16.mxu0 0
      %463 = vmatpush1.bf16.msra.mxu0 0
      %464 = vmatprep.subr.bf16.mxu0 0
      %465 = vmatpush1.bf16.msra.mxu0 0
      %466 = vmatprep.subr.bf16.mxu0 0
      %467 = vmatpush1.bf16.msra.mxu0 0
      %468 = vmatprep.subr.bf16.mxu0 0
      %469 = vmatpush1.bf16.msra.mxu0 0
      %470 = vmatprep.subr.bf16.mxu0 0
      %471 = vmatpush1.bf16.msra.mxu0 0
      %472 = vmatprep.subr.bf16.mxu0 0
      %473 = vmatpush1.bf16.msra.mxu0 0
      %474 = vmatprep.subr.bf16.mxu0 0
      %475 = vmatpush1.bf16.msra.mxu0 0
      %476 = vmatprep.subr.bf16.mxu0 0
      %477 = vmatpush1.bf16.msra.mxu0 0
      %478 = vmatprep.subr.bf16.mxu0 0
      %479 = vmatpush1.bf16.msra.mxu0 0
      %480 = vmatprep.subr.bf16.mxu0 0
      %481 = vmatpush1.bf16.msra.mxu0 0
      %482 = vmatprep.subr.bf16.mxu0 0
      %483 = vmatpush1.bf16.msra.mxu0 0
      %484 = vmatprep.subr.bf16.mxu0 0
      %485 = vmatpush1.bf16.msra.mxu0 0
      %486 = vmatprep.subr.bf16.mxu0 0
      %487 = vmatpush1.bf16.msra.mxu0 0
      %488 = vmatprep.mubr.bf16.mxu0 0
      %489 = vmatmul.mubr.bf16.gmra.mrb[0].mxu0 %v450
      %v490 = vpop.f32.mrb[0].mxu0
      %v491 = vadd.f32 0.0, %v490
      %v492 = vpop.f32.mrb[0].mxu0
      %v493 = vpop.f32.mrb[0].mxu0
      %v494 = vpop.f32.mrb[0].mxu0
      %495 = vdwg.mxu0
      %497 = vrot.lane.b32.xlu0 %v383, 112
      %v498 = vpop.permute.xlu0 %497
      %499 = vrot.lane.b32.xlu0 %v384, 48
      %v500 = vpop.permute.xlu0 %499
      %v502 = vsel %vm389, %v498, 0
      %v505 = vsel %vm389, %v500, 0
      %507 = vmatprep.subr.bf16.mxu0 0
      %508 = vmatpush1.bf16.xpose.msra.mxu0 %v505
      %509 = vmatprep.subr.bf16.mxu0 0
      %510 = vmatpush1.bf16.xpose.msra.mxu0 0
      %511 = vmatprep.subr.bf16.mxu0 0
      %512 = vmatpush1.bf16.xpose.msra.mxu0 0
      %513 = vmatprep.subr.bf16.mxu0 0
      %514 = vmatpush1.bf16.xpose.msra.mxu0 0
      %515 = vmatprep.subr.bf16.mxu0 0
      %516 = vmatpush1.bf16.xpose.msra.mxu0 0
      %517 = vmatprep.subr.bf16.mxu0 0
      %518 = vmatpush1.bf16.xpose.msra.mxu0 0
      %519 = vmatprep.subr.bf16.mxu0 0
      %520 = vmatpush1.bf16.xpose.msra.mxu0 0
      %521 = vmatprep.subr.bf16.mxu0 0
      %522 = vmatpush1.bf16.xpose.msra.mxu0 0
      %523 = vmatprep.subr.bf16.mxu0 0
      %524 = vmatpush1.bf16.xpose.msra.mxu0 0
      %525 = vmatprep.subr.bf16.mxu0 0
      %526 = vmatpush1.bf16.xpose.msra.mxu0 0
      %527 = vmatprep.subr.bf16.mxu0 0
      %528 = vmatpush1.bf16.xpose.msra.mxu0 0
      %529 = vmatprep.subr.bf16.mxu0 0
      %530 = vmatpush1.bf16.xpose.msra.mxu0 0
      %531 = vmatprep.subr.bf16.mxu0 0
      %532 = vmatpush1.bf16.xpose.msra.mxu0 0
      %533 = vmatprep.subr.bf16.mxu0 0
      %534 = vmatpush1.bf16.xpose.msra.mxu0 0
      %535 = vmatprep.subr.bf16.mxu0 0
      %536 = vmatpush1.bf16.xpose.msra.mxu0 0
      %537 = vmatprep.subr.bf16.mxu0 0
      %538 = vmatpush1.bf16.xpose.msra.mxu0 0
      %539 = vmatprep.mubr.bf16.mxu0 0
      %540 = vmatmul.mubr.bf16.gmra.mrb[0].mxu0 %v502
      %v541 = vpop.f32.mrb[0].mxu0
      %v542 = vadd.f32 0.0, %v541
      %v543 = vpop.f32.mrb[0].mxu0
      %v544 = vpop.f32.mrb[0].mxu0
      %v545 = vpop.f32.mrb[0].mxu0
      %546 = vdwg.mxu0
      %v547 = vsel %vm436, %v542, -inf
      %548 = vmax.xlane.f32.xlu0 %v547
      %v549 = vpop.xlane.xlu0 %548
      %v550 = vsub.f32 %v542, %v549
      %v551 = vmul.f32 %v550, 1.442695
      %v552 = vpow.pop %v551
      %v553 = vsel %vm436, %v552, 0.0
      %554 = vadd.xlane.f32.xlu0 %v553
      %v555 = vpop.xlane.xlu0 %554
      %v556 = vrcp.pop %v555
      %v557 = vmul.f32 %v552, %v556
      %v558 = vpack.c.bf16 %v557, %v557
      %560 = vrot.lane.b32.xlu0 %v385, 112
      %v561 = vpop.permute.xlu0 %560
      %v563 = vsel %vm436, %v558, 0
      %v566 = vsel %vm452, %v561, 0
      %568 = vmatprep.subr.bf16.mxu0 0
      %569 = vmatpush1.bf16.msra.mxu0 %v566
      %570 = vmatprep.subr.bf16.mxu0 0
      %571 = vmatpush1.bf16.msra.mxu0 0
      %572 = vmatprep.subr.bf16.mxu0 0
      %573 = vmatpush1.bf16.msra.mxu0 0
      %574 = vmatprep.subr.bf16.mxu0 0
      %575 = vmatpush1.bf16.msra.mxu0 0
      %576 = vmatprep.subr.bf16.mxu0 0
      %577 = vmatpush1.bf16.msra.mxu0 0
      %578 = vmatprep.subr.bf16.mxu0 0
      %579 = vmatpush1.bf16.msra.mxu0 0
      %580 = vmatprep.subr.bf16.mxu0 0
      %581 = vmatpush1.bf16.msra.mxu0 0
      %582 = vmatprep.subr.bf16.mxu0 0
      %583 = vmatpush1.bf16.msra.mxu0 0
      %584 = vmatprep.subr.bf16.mxu0 0
      %585 = vmatpush1.bf16.msra.mxu0 0
      %586 = vmatprep.subr.bf16.mxu0 0
      %587 = vmatpush1.bf16.msra.mxu0 0
      %588 = vmatprep.subr.bf16.mxu0 0
      %589 = vmatpush1.bf16.msra.mxu0 0
      %590 = vmatprep.subr.bf16.mxu0 0
      %591 = vmatpush1.bf16.msra.mxu0 0
      %592 = vmatprep.subr.bf16.mxu0 0
      %593 = vmatpush1.bf16.msra.mxu0 0
      %594 = vmatprep.subr.bf16.mxu0 0
      %595 = vmatpush1.bf16.msra.mxu0 0
      %596 = vmatprep.subr.bf16.mxu0 0
      %597 = vmatpush1.bf16.msra.mxu0 0
      %598 = vmatprep.subr.bf16.mxu0 0
      %599 = vmatpush1.bf16.msra.mxu0 0
      %600 = vmatprep.mubr.bf16.mxu0 0
      %601 = vmatmul.mubr.bf16.gmra.mrb[0].mxu0 %v563
      %v602 = vpop.f32.mrb[0].mxu0
      %v603 = vadd.f32 0.0, %v602
      %v604 = vpop.f32.mrb[0].mxu0
      %v605 = vpop.f32.mrb[0].mxu0
      %v606 = vpop.f32.mrb[0].mxu0
      %607 = vdwg.mxu0
      %608 = vrot.lane.b32.xlu0 %v383, 96
      %v609 = vpop.permute.xlu0 %608
      %610 = vrot.lane.b32.xlu0 %v384, 32
      %v611 = vpop.permute.xlu0 %610
      %v613 = vsel %vm389, %v609, 0
      %v616 = vsel %vm389, %v611, 0
      %618 = vmatprep.subr.bf16.mxu0 0
      %619 = vmatpush1.bf16.xpose.msra.mxu0 %v616
      %620 = vmatprep.subr.bf16.mxu0 0
      %621 = vmatpush1.bf16.xpose.msra.mxu0 0
      %622 = vmatprep.subr.bf16.mxu0 0
      %623 = vmatpush1.bf16.xpose.msra.mxu0 0
      %624 = vmatprep.subr.bf16.mxu0 0
      %625 = vmatpush1.bf16.xpose.msra.mxu0 0
      %626 = vmatprep.subr.bf16.mxu0 0
      %627 = vmatpush1.bf16.xpose.msra.mxu0 0
      %628 = vmatprep.subr.bf16.mxu0 0
      %629 = vmatpush1.bf16.xpose.msra.mxu0 0
      %630 = vmatprep.subr.bf16.mxu0 0
      %631 = vmatpush1.bf16.xpose.msra.mxu0 0
      %632 = vmatprep.subr.bf16.mxu0 0
      %633 = vmatpush1.bf16.xpose.msra.mxu0 0
      %634 = vmatprep.subr.bf16.mxu0 0
      %635 = vmatpush1.bf16.xpose.msra.mxu0 0
      %636 = vmatprep.subr.bf16.mxu0 0
      %637 = vmatpush1.bf16.xpose.msra.mxu0 0
      %638 = vmatprep.subr.bf16.mxu0 0
      %639 = vmatpush1.bf16.xpose.msra.mxu0 0
      %640 = vmatprep.subr.bf16.mxu0 0
      %641 = vmatpush1.bf16.xpose.msra.mxu0 0
      %642 = vmatprep.subr.bf16.mxu0 0
      %643 = vmatpush1.bf16.xpose.msra.mxu0 0
      %644 = vmatprep.subr.bf16.mxu0 0
      %645 = vmatpush1.bf16.xpose.msra.mxu0 0
      %646 = vmatprep.subr.bf16.mxu0 0
      %647 = vmatpush1.bf16.xpose.msra.mxu0 0
      %648 = vmatprep.subr.bf16.mxu0 0
      %649 = vmatpush1.bf16.xpose.msra.mxu0 0
      %650 = vmatprep.mubr.bf16.mxu0 0
      %651 = vmatmul.mubr.bf16.gmra.mrb[0].mxu0 %v613
      %v652 = vpop.f32.mrb[0].mxu0
      %v653 = vadd.f32 0.0, %v652
      %v654 = vpop.f32.mrb[0].mxu0
      %v655 = vpop.f32.mrb[0].mxu0
      %v656 = vpop.f32.mrb[0].mxu0
      %657 = vdwg.mxu0
      %v658 = vsel %vm436, %v653, -inf
      %659 = vmax.xlane.f32.xlu0 %v658
      %v660 = vpop.xlane.xlu0 %659
      %v661 = vsub.f32 %v653, %v660
      %v662 = vmul.f32 %v661, 1.442695
      %v663 = vpow.pop %v662
      %v664 = vsel %vm436, %v663, 0.0
      %665 = vadd.xlane.f32.xlu0 %v664
      %v666 = vpop.xlane.xlu0 %665
      %v667 = vrcp.pop %v666
      %v668 = vmul.f32 %v663, %v667
      %v669 = vpack.c.bf16 %v668, %v668
      %670 = vrot.lane.b32.xlu0 %v385, 96
      %v671 = vpop.permute.xlu0 %670
      %v673 = vsel %vm436, %v669, 0
      %v676 = vsel %vm452, %v671, 0
      %678 = vmatprep.subr.bf16.mxu0 0
      %679 = vmatpush1.bf16.msra.mxu0 %v676
      %680 = vmatprep.subr.bf16.mxu0 0
      %681 = vmatpush1.bf16.msra.mxu0 0
      %682 = vmatprep.subr.bf16.mxu0 0
      %683 = vmatpush1.bf16.msra.mxu0 0
      %684 = vmatprep.subr.bf16.mxu0 0
      %685 = vmatpush1.bf16.msra.mxu0 0
      %686 = vmatprep.subr.bf16.mxu0 0
      %687 = vmatpush1.bf16.msra.mxu0 0
      %688 = vmatprep.subr.bf16.mxu0 0
      %689 = vmatpush1.bf16.msra.mxu0 0
      %690 = vmatprep.subr.bf16.mxu0 0
      %691 = vmatpush1.bf16.msra.mxu0 0
      %692 = vmatprep.subr.bf16.mxu0 0
      %693 = vmatpush1.bf16.msra.mxu0 0
      %694 = vmatprep.subr.bf16.mxu0 0
      %695 = vmatpush1.bf16.msra.mxu0 0
      %696 = vmatprep.subr.bf16.mxu0 0
      %697 = vmatpush1.bf16.msra.mxu0 0
      %698 = vmatprep.subr.bf16.mxu0 0
      %699 = vmatpush1.bf16.msra.mxu0 0
      %700 = vmatprep.subr.bf16.mxu0 0
      %701 = vmatpush1.bf16.msra.mxu0 0
      %702 = vmatprep.subr.bf16.mxu0 0
      %703 = vmatpush1.bf16.msra.mxu0 0
      %704 = vmatprep.subr.bf16.mxu0 0
      %705 = vmatpush1.bf16.msra.mxu0 0
      %706 = vmatprep.subr.bf16.mxu0 0
      %707 = vmatpush1.bf16.msra.mxu0 0
      %708 = vmatprep.subr.bf16.mxu0 0
      %709 = vmatpush1.bf16.msra.mxu0 0
      %710 = vmatprep.mubr.bf16.mxu0 0
      %711 = vmatmul.mubr.bf16.gmra.mrb[0].mxu0 %v673
      %v712 = vpop.f32.mrb[0].mxu0
      %v713 = vadd.f32 0.0, %v712
      %v714 = vpop.f32.mrb[0].mxu0
      %v715 = vpop.f32.mrb[0].mxu0
      %v716 = vpop.f32.mrb[0].mxu0
      %717 = vdwg.mxu0
      %718 = vrot.lane.b32.xlu0 %v383, 80
      %v719 = vpop.permute.xlu0 %718
      %720 = vrot.lane.b32.xlu0 %v384, 16
      %v721 = vpop.permute.xlu0 %720
      %v723 = vsel %vm389, %v719, 0
      %v726 = vsel %vm389, %v721, 0
      %728 = vmatprep.subr.bf16.mxu0 0
      %729 = vmatpush1.bf16.xpose.msra.mxu0 %v726
      %730 = vmatprep.subr.bf16.mxu0 0
      %731 = vmatpush1.bf16.xpose.msra.mxu0 0
      %732 = vmatprep.subr.bf16.mxu0 0
      %733 = vmatpush1.bf16.xpose.msra.mxu0 0
      %734 = vmatprep.subr.bf16.mxu0 0
      %735 = vmatpush1.bf16.xpose.msra.mxu0 0
      %736 = vmatprep.subr.bf16.mxu0 0
      %737 = vmatpush1.bf16.xpose.msra.mxu0 0
      %738 = vmatprep.subr.bf16.mxu0 0
      %739 = vmatpush1.bf16.xpose.msra.mxu0 0
      %740 = vmatprep.subr.bf16.mxu0 0
      %741 = vmatpush1.bf16.xpose.msra.mxu0 0
      %742 = vmatprep.subr.bf16.mxu0 0
      %743 = vmatpush1.bf16.xpose.msra.mxu0 0
      %744 = vmatprep.subr.bf16.mxu0 0
      %745 = vmatpush1.bf16.xpose.msra.mxu0 0
      %746 = vmatprep.subr.bf16.mxu0 0
      %747 = vmatpush1.bf16.xpose.msra.mxu0 0
      %748 = vmatprep.subr.bf16.mxu0 0
      %749 = vmatpush1.bf16.xpose.msra.mxu0 0
      %750 = vmatprep.subr.bf16.mxu0 0
      %751 = vmatpush1.bf16.xpose.msra.mxu0 0
      %752 = vmatprep.subr.bf16.mxu0 0
      %753 = vmatpush1.bf16.xpose.msra.mxu0 0
      %754 = vmatprep.subr.bf16.mxu0 0
      %755 = vmatpush1.bf16.xpose.msra.mxu0 0
      %756 = vmatprep.subr.bf16.mxu0 0
      %757 = vmatpush1.bf16.xpose.msra.mxu0 0
      %758 = vmatprep.subr.bf16.mxu0 0
      %759 = vmatpush1.bf16.xpose.msra.mxu0 0
      %760 = vmatprep.mubr.bf16.mxu0 0
      %761 = vmatmul.mubr.bf16.gmra.mrb[0].mxu0 %v723
      %v762 = vpop.f32.mrb[0].mxu0
      %v763 = vadd.f32 0.0, %v762
      %v764 = vpop.f32.mrb[0].mxu0
      %v765 = vpop.f32.mrb[0].mxu0
      %v766 = vpop.f32.mrb[0].mxu0
      %767 = vdwg.mxu0
      %v768 = vsel %vm436, %v763, -inf
      %769 = vmax.xlane.f32.xlu0 %v768
      %v770 = vpop.xlane.xlu0 %769
      %v771 = vsub.f32 %v763, %v770
      %v772 = vmul.f32 %v771, 1.442695
      %v773 = vpow.pop %v772
      %v774 = vsel %vm436, %v773, 0.0
      %775 = vadd.xlane.f32.xlu0 %v774
      %v776 = vpop.xlane.xlu0 %775
      %v777 = vrcp.pop %v776
      %v778 = vmul.f32 %v773, %v777
      %v779 = vpack.c.bf16 %v778, %v778
      %780 = vrot.lane.b32.xlu0 %v385, 80
      %v781 = vpop.permute.xlu0 %780
      %v783 = vsel %vm436, %v779, 0
      %v786 = vsel %vm452, %v781, 0
      %788 = vmatprep.subr.bf16.mxu0 0
      %789 = vmatpush1.bf16.msra.mxu0 %v786
      %790 = vmatprep.subr.bf16.mxu0 0
      %791 = vmatpush1.bf16.msra.mxu0 0
      %792 = vmatprep.subr.bf16.mxu0 0
      %793 = vmatpush1.bf16.msra.mxu0 0
      %794 = vmatprep.subr.bf16.mxu0 0
      %795 = vmatpush1.bf16.msra.mxu0 0
      %796 = vmatprep.subr.bf16.mxu0 0
      %797 = vmatpush1.bf16.msra.mxu0 0
      %798 = vmatprep.subr.bf16.mxu0 0
      %799 = vmatpush1.bf16.msra.mxu0 0
      %800 = vmatprep.subr.bf16.mxu0 0
      %801 = vmatpush1.bf16.msra.mxu0 0
      %802 = vmatprep.subr.bf16.mxu0 0
      %803 = vmatpush1.bf16.msra.mxu0 0
      %804 = vmatprep.subr.bf16.mxu0 0
      %805 = vmatpush1.bf16.msra.mxu0 0
      %806 = vmatprep.subr.bf16.mxu0 0
      %807 = vmatpush1.bf16.msra.mxu0 0
      %808 = vmatprep.subr.bf16.mxu0 0
      %809 = vmatpush1.bf16.msra.mxu0 0
      %810 = vmatprep.subr.bf16.mxu0 0
      %811 = vmatpush1.bf16.msra.mxu0 0
      %812 = vmatprep.subr.bf16.mxu0 0
      %813 = vmatpush1.bf16.msra.mxu0 0
      %814 = vmatprep.subr.bf16.mxu0 0
      %815 = vmatpush1.bf16.msra.mxu0 0
      %816 = vmatprep.subr.bf16.mxu0 0
      %817 = vmatpush1.bf16.msra.mxu0 0
      %818 = vmatprep.subr.bf16.mxu0 0
      %819 = vmatpush1.bf16.msra.mxu0 0
      %820 = vmatprep.mubr.bf16.mxu0 0
      %821 = vmatmul.mubr.bf16.gmra.mrb[0].mxu0 %v783
      %v822 = vpop.f32.mrb[0].mxu0
      %v823 = vadd.f32 0.0, %v822
      %v824 = vpop.f32.mrb[0].mxu0
      %v825 = vpop.f32.mrb[0].mxu0
      %v826 = vpop.f32.mrb[0].mxu0
      %827 = vdwg.mxu0
      %829 = vrot.lane.b32.xlu0 %v603, 16
      %v830 = vpop.permute.xlu0 %829
      %833 = vrot.lane.b32.xlu0 %v713, 32
      %v834 = vpop.permute.xlu0 %833
      %837 = vrot.lane.b32.xlu0 %v823, 48
      %v838 = vpop.permute.xlu0 %837
      %v840 = vsel %vm389, %v491, %v830
      %vm841 = vcmask 261120
      %v842 = vsel %vm841, %v840, %v834
      %vm843 = vcmask 392192
      %v844 = vsel %vm843, %v842, %v838
      %v845 = vpack.c.bf16 %v844, %v844
      %v846 = vld [vmem:[%s3] sm:$0xf]
      %v847 = vld [vmem:[%s3 + $0x4] sm:$0xf]
      %v848 = vld [vmem:[%s3 + $0x8] sm:$0xf]
      %v849 = vld [vmem:[%s3 + $0xc] sm:$0xf]
      %v850 = vld [vmem:[%s3 + $0x10] sm:$0xf]
      %v851 = vld [vmem:[%s3 + $0x14] sm:$0xf]
      %v852 = vld [vmem:[%s3 + $0x18] sm:$0xf]
      %v853 = vld [vmem:[%s3 + $0x1c] sm:$0xf]
      %v854 = vld [vmem:[%s4] sm:$0x1]
      %v856 = vlaneseq
      %v857 = vshrl.u32 %v856, 7
      %v858 = vsub.s32 0, %v857
      %v859 = vrot.slane %v854, %v858
      %v869 = vunpack.c.l.b16 %v846
      %v870 = vunpack.c.l.b16 %v847
      %v871 = vunpack.c.l.b16 %v848
      %v872 = vunpack.c.l.b16 %v849
      %v873 = vunpack.c.l.b16 %v850
      %v874 = vunpack.c.l.b16 %v851
      %v875 = vunpack.c.l.b16 %v852
      %v876 = vunpack.c.l.b16 %v853
      %v877 = vpack.c.b16 %v870, %v869
      %v878 = vpack.c.b16 %v872, %v871
      %v879 = vpack.c.b16 %v874, %v873
      %v880 = vpack.c.b16 %v876, %v875
      %v886 = vsel %vm337, %v845, 0
      %888 = vmatprep.subr.bf16.mxu0 0
      %889 = vmatpush1.bf16.msra.mxu0 %v877
      %890 = vmatprep.subr.bf16.mxu0 0
      %891 = vmatpush1.bf16.msra.mxu0 %v878
      %892 = vmatprep.subr.bf16.mxu0 0
      %893 = vmatpush1.bf16.msra.mxu0 %v879
      %894 = vmatprep.subr.bf16.mxu0 0
      %895 = vmatpush1.bf16.msra.mxu0 %v880
      %896 = vmatprep.subr.bf16.mxu0 0
      %897 = vmatpush1.bf16.msra.mxu0 0
      %898 = vmatprep.subr.bf16.mxu0 0
      %899 = vmatpush1.bf16.msra.mxu0 0
      %900 = vmatprep.subr.bf16.mxu0 0
      %901 = vmatpush1.bf16.msra.mxu0 0
      %902 = vmatprep.subr.bf16.mxu0 0
      %903 = vmatpush1.bf16.msra.mxu0 0
      %904 = vmatprep.subr.bf16.mxu0 0
      %905 = vmatpush1.bf16.msra.mxu0 0
      %906 = vmatprep.subr.bf16.mxu0 0
      %907 = vmatpush1.bf16.msra.mxu0 0
      %908 = vmatprep.subr.bf16.mxu0 0
      %909 = vmatpush1.bf16.msra.mxu0 0
      %910 = vmatprep.subr.bf16.mxu0 0
      %911 = vmatpush1.bf16.msra.mxu0 0
      %912 = vmatprep.subr.bf16.mxu0 0
      %913 = vmatpush1.bf16.msra.mxu0 0
      %914 = vmatprep.subr.bf16.mxu0 0
      %915 = vmatpush1.bf16.msra.mxu0 0
      %916 = vmatprep.subr.bf16.mxu0 0
      %917 = vmatpush1.bf16.msra.mxu0 0
      %918 = vmatprep.subr.bf16.mxu0 0
      %919 = vmatpush1.bf16.msra.mxu0 0
      %920 = vmatprep.mubr.bf16.mxu0 0
      %921 = vmatmul.mubr.bf16.gmra.mrb[0].mxu0 %v886
      %v922 = vpop.f32.mrb[0].mxu0
      %v923 = vadd.f32 %v859, %v922
      %v924 = vpop.f32.mrb[0].mxu0
      %v925 = vpop.f32.mrb[0].mxu0
      %v926 = vpop.f32.mrb[0].mxu0
      %927 = vdwg.mxu0
      %v928 = vadd.f32 %v275, %v923
      %v929 = vld [vmem:[%s5] sm:$0x1]
      %v930 = vld [vmem:[%s6] sm:$0x1]
      %v931 = vsel %vm337, %v928, 0.0
      %932 = vadd.xlane.f32.xlu0 %v931
      %v933 = vpop.xlane.xlu0 %932
      %v934 = vrcp.pop 64.0
      %v935 = vmul.f32 %v933, %v934
      %v936 = vsub.f32 %v928, %v935
      %v937 = vmul.f32 %v936, %v936
      %v938 = vsel %vm337, %v937, 0.0
      %939 = vadd.xlane.f32.xlu0 %v938
      %v940 = vpop.xlane.xlu0 %939
      %v941 = vmul.f32 %v940, %v934
      %v942 = vadd.f32 %v941, 1e-05
      %v943 = vrsqrt.pop %v942
      %v944 = vmul.f32 %v936, %v943
      %v946 = vlaneseq
      %v947 = vshrl.u32 %v946, 7
      %v948 = vsub.s32 0, %v947
      %v949 = vrot.slane %v929, %v948
      %v951 = vmul.f32 %v944, %v949
      %v953 = vlaneseq
      %v954 = vshrl.u32 %v953, 7
      %v955 = vsub.s32 0, %v954
      %v956 = vrot.slane %v930, %v955
      %v958 = vadd.f32 %v951, %v956
      %959 = vst.msk [vmem:[%s273] sm:$0xff] %vm337, %v958
      %p960 = scmp.lt.s32.totalorder %s18, 1
      %s961 = scalar_select %p960, %s18, 1
      %s962 = smul.addr %s961, 8
      %s963 = scalar_lea.vmem %s7, %s962
      // Predicated region
      $region49: #{transformer_model.7} parent=47 // pred_check
        %p964 = pneg %p188
      $region50: #{transformer_model.7} parent=47 // pred_check_branch
        %966 = sbr.rel (%p964) target = $region52
      $region51: #{transformer_model.7} parent=47 // pred_region
        _
      $region52: #{transformer_model.7} parent=47 // pred_fallthru
        _
    $region48: #{transformer_model.7} parent=5 // pred_fallthru
      _
    %p967 = scmp.le.s32.totalorder 2, %s13
    // Predicated region
    $region53: #{transformer_model.7} parent=5 // pred_check
      %p968 = pneg %p967
    $region54: #{transformer_model.7} parent=5 // pred_check_branch
      %970 = sbr.rel (%p968) target = $region56
    $region55: #{transformer_model.7} parent=5 // pred_region
      %s971 = ssub.s32 %s13, 2
      // Predicated region
      $region57: #{transformer_model.7} parent=55 // pred_check
        %p972 = pneg %p194
      $region58: #{transformer_model.7} parent=55 // pred_check_branch
        %974 = sbr.rel (%p972) target = $region60
      $region59: #{transformer_model.7} parent=55 // pred_region
        %p975 = scmp.lt.s32.totalorder %s19, 1
        %s976 = scalar_select %p975, %s19, 1
        %s977 = smul.addr %s976, 8
        %s978 = scalar_lea.vmem %s7, %s977
      $region60: #{transformer_model.7} parent=55 // pred_fallthru
        _
    $region56: #{transformer_model.7} parent=5 // pred_fallthru
      _
  $region6: #{transformer_model.7} parent=0 // loop_footer
    %s17 = sadd.s32 1, %s13
  $region7: #{transformer_model.7} parent=0 // loop_footer_branch
    %12 = sbr.rel target = $region3
  $region8: #{transformer_model.7} parent=0 // loop_exit
    _

</llo_original>
